<compile_context>
chip_gen: v7x
topology: tpu7x:2x2x1
jax: 0.10.0
libtpu: 0.0.40
codegen_flags: <defaults>
</compile_context>

<pallas_src>
import math
import jax
import jax.numpy as jnp
from jax.experimental import pallas as pl

# ----------------------------- model sizes (small) -----------------------------
B = 2            # batch
S = 8            # sequence length
V = 50           # vocab size (synthetic)
H = 32           # hidden size
NH = 2           # attention heads
DH = H // NH     # head dim
FF = 64          # FFN intermediate size
P = 16           # projector output dim (PCA head size)

N = B * S        # number of real token rows
NTOT = N + B     # + one appended CLS copy per batch item (queries / residual)
VP = 56          # vocab rows padded up to a sublane multiple
HP = NH * 128    # head-padded width of each of q/k/v (one 128-lane block per head)
FFP = 128        # FFN intermediate padded to one lane tile
PPAD = 128       # projector output padded to one lane tile (lane-dense store)

# w_slab_a column layout: [ Wq_hp | Wk_hp | Wv_hp | W1_pad | Wp_pad ], row H = biases
C_W1 = 3 * HP            # 768
C_WP = C_W1 + FFP        # 896
WA_COLS = C_WP + PPAD    # 1024

# w_slab_b row layout: [ Wo_hp (HP) | W2_pad (FFP) | bo b2 g1 be1 g2 be2 pad pad ]
R_BO = HP + FFP          # 384
R_B2, R_G1, R_BE1, R_G2, R_BE2 = R_BO + 1, R_BO + 2, R_BO + 3, R_BO + 4, R_BO + 5
WB_ROWS = R_BO + 8       # 392 (tail padded to a full sublane tile)

NEG_INF = -1e9


# ------------------------------ Pallas kernel -----------------------------------
def _layernorm(v, gamma, beta, eps=1e-5):
    mu = jnp.mean(v, axis=-1, keepdims=True)
    d = v - mu
    var = jnp.mean(d * d, axis=-1, keepdims=True)
    return d * jax.lax.rsqrt(var + eps) * gamma + beta


def fused_encoder_projector_kernel(ids_ref, abias_ref, emb_ref, wa_ref, wb_ref, out_ref):
    # ---- token + position embeddings, in-kernel (one-hot MXU gather) ----
    ids = ids_ref[...]                                   # [NTOT, 1] int32 (last B rows repeat the CLS ids)
    onehot = (jax.lax.broadcasted_iota(jnp.int32, (NTOT, VP), 1) == ids).astype(jnp.float32)
    emb = emb_ref[...]                                   # [VP + NTOT, H] = [tok_emb_pad ; pos_aug]
    x = jnp.dot(onehot, emb[0:VP, :],
                preferred_element_type=jnp.float32) + emb[VP:VP + NTOT, :]
    # rows 0..N-1: all tokens (keys/values); rows N..NTOT-1: per-batch CLS rows (queries/residual)

    # ---- fused QKV projection: one MXU op, q pre-scaled by 1/sqrt(DH), heads 128-lane padded ----
    wqkv = wa_ref[0:H, 0:3 * HP]                         # [H, 768]
    bqkv = wa_ref[H:H + 1, 0:3 * HP]                     # [1, 768]
    qkv = jnp.dot(x, wqkv, preferred_element_type=jnp.float32) + bqkv
    q, k, v = qkv[:, 0:HP], qkv[:, HP:2 * HP], qkv[:, 2 * HP:3 * HP]

    abias = abias_ref[...]                               # [B, S]  precomputed (1 - mask) * NEG_INF

    # ---- attention restricted to the CLS query row of each batch item ----
    ctx_rows = []
    for b in range(B):                                   # tiny static loops (B=2, NH=2)
        qb = q[N + b:N + b + 1, :]                       # [1, HP]  CLS query
        kb = k[b * S:(b + 1) * S, :]                     # [S, HP]
        vb = v[b * S:(b + 1) * S, :]                     # [S, HP]
        bias = abias[b:b + 1, :]                         # [1, S]
        heads = []
        for h in range(NH):
            c0 = h * 128                                 # lane-tile aligned head block
            s_ = jax.lax.dot_general(                    # q.k^T with no transpose (contract dim 1 of both)
                qb[:, c0:c0 + 128], kb[:, c0:c0 + 128],
                (((1,), (1,)), ((), ())),
                preferred_element_type=jnp.float32) + bias
            s_ = s_ - jnp.max(s_, axis=-1, keepdims=True)
            p = jnp.exp(s_)
            p = p * pl.reciprocal(jnp.sum(p, axis=-1, keepdims=True), approx=True)
            heads.append(jnp.dot(p, vb[:, c0:c0 + 128],  # [1, 128] context (zeros beyond DH)
                                 preferred_element_type=jnp.float32))
        ctx_rows.append(jnp.concatenate(heads, axis=1))  # [1, HP] — stays in vregs, no VMEM scratch
    ctx = jnp.concatenate(ctx_rows, axis=0)              # [B, HP]

    # ---- output projection + LN1 + FFN + LN2, on CLS rows only ----
    tail = wb_ref[R_BO:WB_ROWS, :]                       # [8, H]: bo, b2, g1, be1, g2, be2, pad, pad
    bo, b2 = tail[0:1, :], tail[1:2, :]
    g1, be1 = tail[2:3, :], tail[3:4, :]
    g2, be2 = tail[4:5, :], tail[5:6, :]

    x_cls = x[N:NTOT, :]                                 # [B, H]
    attn_out = jnp.dot(ctx, wb_ref[0:HP, :], preferred_element_type=jnp.float32) + bo
    h1 = _layernorm(x_cls + attn_out, g1, be1)

    ffn = jnp.dot(h1, wa_ref[0:H, C_W1:C_W1 + FFP],
                  preferred_element_type=jnp.float32) + wa_ref[H:H + 1, C_W1:C_W1 + FFP]
    # TODO(synk): HF/PyTorch BERT default is exact erf GELU; tanh approximation kept here.
    ffn = jax.nn.gelu(ffn, approximate=True)             # padded lanes stay 0 (gelu(0)=0, W2 rows zero)
    ffn = jnp.dot(ffn, wb_ref[HP:HP + FFP, :], preferred_element_type=jnp.float32) + b2
    h2 = _layernorm(h1 + ffn, g2, be2)

    # ---- dropout (identity at eval) + projector: lane-dense 128-wide unmasked store ----
    out_ref[...] = (jnp.dot(h2, wa_ref[0:H, C_WP:C_WP + PPAD],
                            preferred_element_type=jnp.float32)
                    + wa_ref[H:H + 1, C_WP:C_WP + PPAD])


# ------------------------------ Python wrapper -----------------------------------
@jax.jit
def emotion_embedding_forward(input_ids, attention_mask, params):
    emb_slab, w_a, w_b = params
    # Runtime-only operands (kept separate from the constant weight slabs):
    #   ids_aug: flattened token ids + one CLS-id copy per batch item.
    ids_aug = jnp.concatenate(
        [input_ids.reshape(-1), input_ids[:, 0]], axis=0
    ).astype(jnp.int32).reshape(NTOT, 1)
    #   abias: additive attention bias, precomputed on host (drops the mask math from the kernel).
    abias = (1.0 - attention_mask.astype(jnp.float32)) * NEG_INF          # [B, S]

    out_pad = pl.pallas_call(
        fused_encoder_projector_kernel,
        out_shape=jax.ShapeDtypeStruct((B, PPAD), jnp.float32),
    )(ids_aug, abias, emb_slab, w_a, w_b)

    return out_pad[:, :P]                                                 # [B, P]


# ------------------------------ parameter packing --------------------------------
def init_params(key):
    ks = jax.random.split(key, 16)
    scale = 0.02

    def lin(k, fi, fo):
        return scale * jax.random.normal(k, (fi, fo), jnp.float32)

    def vec(k, n):
        return scale * jax.random.normal(k, (n,), jnp.float32)

    tok_emb = scale * jax.random.normal(ks[0], (V, H), jnp.float32)
    pos_emb = scale * jax.random.normal(ks[1], (S, H), jnp.float32)
    wq, wk, wv, wo = lin(ks[2], H, H), lin(ks[3], H, H), lin(ks[4], H, H), lin(ks[5], H, H)
    w1, w2, wp = lin(ks[6], H, FF), lin(ks[7], FF, H), lin(ks[8], H, P)
    bq, bk, bv, bo = vec(ks[9], H), vec(ks[10], H), vec(ks[11], H), vec(ks[12], H)
    b1, b2, bp = vec(ks[13], FF), vec(ks[14], H), vec(ks[15], P)
    g1, be1 = jnp.ones((H,), jnp.float32), jnp.zeros((H,), jnp.float32)
    g2, be2 = jnp.ones((H,), jnp.float32), jnp.zeros((H,), jnp.float32)

    inv_sqrt_dh = 1.0 / math.sqrt(DH)

    # ---- embedding slab: [tok_emb padded to VP rows ; pos tiled + CLS-position rows] ----
    pos_aug = jnp.concatenate([jnp.tile(pos_emb, (B, 1)), jnp.tile(pos_emb[:1, :], (B, 1))], axis=0)
    emb_slab = jnp.zeros((VP + NTOT, H), jnp.float32)
    emb_slab = emb_slab.at[:V, :].set(tok_emb)
    emb_slab = emb_slab.at[VP:VP + NTOT, :].set(pos_aug)

    # ---- head-padding helpers: each head goes to its own 128-lane block ----
    def head_pad_cols(w):                       # [H, H] -> [H, HP]
        out = jnp.zeros((H, HP), jnp.float32)
        for h in range(NH):
            out = out.at[:, h * 128:h * 128 + DH].set(w[:, h * DH:(h + 1) * DH])
        return out

    def head_pad_vec(b):                        # [H] -> [HP]
        out = jnp.zeros((HP,), jnp.float32)
        for h in range(NH):
            out = out.at[h * 128:h * 128 + DH].set(b[h * DH:(h + 1) * DH])
        return out

    def head_pad_rows(w):                       # [H, H] -> [HP, H]
        out = jnp.zeros((HP, H), jnp.float32)
        for h in range(NH):
            out = out.at[h * 128:h * 128 + DH, :].set(w[h * DH:(h + 1) * DH, :])
        return out

    # ---- w_slab_a: all H-row weights lane-concatenated, biases in row H ----
    w_a = jnp.zeros((H + 1, WA_COLS), jnp.float32)
    w_a = w_a.at[:H, 0:HP].set(head_pad_cols(wq) * inv_sqrt_dh)   # 1/sqrt(DH) folded into Wq
    w_a = w_a.at[:H, HP:2 * HP].set(head_pad_cols(wk))
    w_a = w_a.at[:H, 2 * HP:3 * HP].set(head_pad_cols(wv))
    w_a = w_a.at[:H, C_W1:C_W1 + FF].set(w1)
    w_a = w_a.at[:H, C_WP:C_WP + P].set(wp)
    w_a = w_a.at[H, 0:HP].set(head_pad_vec(bq) * inv_sqrt_dh)     # ... and into bq
    w_a = w_a.at[H, HP:2 * HP].set(head_pad_vec(bk))
    w_a = w_a.at[H, 2 * HP:3 * HP].set(head_pad_vec(bv))
    w_a = w_a.at[H, C_W1:C_W1 + FF].set(b1)
    w_a = w_a.at[H, C_WP:C_WP + P].set(bp)

    # ---- w_slab_b: tall weights row-concatenated + small bias/LN rows ----
    w_b = jnp.zeros((WB_ROWS, H), jnp.float32)
    w_b = w_b.at[0:HP, :].set(head_pad_rows(wo))
    w_b = w_b.at[HP:HP + FF, :].set(w2)
    w_b = w_b.at[R_BO, :].set(bo)
    w_b = w_b.at[R_B2, :].set(b2)
    w_b = w_b.at[R_G1, :].set(g1)
    w_b = w_b.at[R_BE1, :].set(be1)
    w_b = w_b.at[R_G2, :].set(g2)
    w_b = w_b.at[R_BE2, :].set(be2)

    return (emb_slab, w_a, w_b)


# ----------------------------------- main ----------------------------------------
if __name__ == "__main__":
    key = jax.random.PRNGKey(0)
    k_ids, k_params = jax.random.split(key)

    input_ids = jax.random.randint(k_ids, (B, S), 0, V, dtype=jnp.int32)
    attention_mask = jnp.ones((B, S), dtype=jnp.int32)
    # make batch element 1 have some padding, like a real tokenizer would
    attention_mask = attention_mask.at[1, 6:].set(0)

    params = init_params(k_params)

    out = emotion_embedding_forward(input_ids, attention_mask, params)
    out = jax.block_until_ready(out)
    assert out.shape == (B, P) and out.dtype == jnp.float32
    assert bool(jnp.isfinite(out).all())
    print("KERNEL_OK")
</pallas_src>

<mosaic_0001>
module attributes {stable_mosaic.version = 11 : i64} {
  func.func @fused_encoder_projector_kernel(%arg0: memref<18x1xi32, #tpu.memory_space<vmem>>, %arg1: memref<2x8xf32, #tpu.memory_space<vmem>>, %arg2: memref<74x32xf32, #tpu.memory_space<vmem>>, %arg3: memref<33x1024xf32, #tpu.memory_space<vmem>>, %arg4: memref<392x32xf32, #tpu.memory_space<vmem>>, %arg5: memref<2x128xf32, #tpu.memory_space<vmem>>) attributes {dimension_semantics = [], scalar_prefetch = 0 : i64, scratch_operands = 0 : i64, tpu.core_type = #tpu.core_type<tc>} {
    %c0 = arith.constant 0 : index
    %c0_0 = arith.constant 0 : index
    %0 = vector.load %arg0[%c0, %c0_0] : memref<18x1xi32, #tpu.memory_space<vmem>>, vector<18x1xi32>
    %1 = tpu.iota {dimensions = array<i32: 1>} : vector<18x56xi32>
    %2 = vector.broadcast %0 : vector<18x1xi32> to vector<18x56xi32>
    %3 = arith.cmpi eq, %1, %2 : vector<18x56xi32>
    %4 = arith.extui %3 : vector<18x56xi1> to vector<18x56xi32>
    %5 = arith.sitofp %4 : vector<18x56xi32> to vector<18x56xf32>
    %c0_1 = arith.constant 0 : index
    %c0_2 = arith.constant 0 : index
    %6 = vector.load %arg2[%c0_1, %c0_2] : memref<74x32xf32, #tpu.memory_space<vmem>>, vector<74x32xf32>
    %7 = vector.extract_strided_slice %6 {offsets = [0, 0], sizes = [56, 32], strides = [1, 1]} : vector<74x32xf32> to vector<56x32xf32>
    %cst = arith.constant dense<0.000000e+00> : vector<18x32xf32>
    %8 = tpu.matmul %5, %7, %cst {dimension_numbers = #tpu.dot_dimension_numbers<[1], [0], [0], [1], [0, 0, 1, 1], [], []>} : vector<18x56xf32>, vector<56x32xf32>, vector<18x32xf32> -> vector<18x32xf32>
    %9 = vector.extract_strided_slice %6 {offsets = [56, 0], sizes = [18, 32], strides = [1, 1]} : vector<74x32xf32> to vector<18x32xf32>
    %10 = arith.addf %8, %9 : vector<18x32xf32>
    %c0_3 = arith.constant 0 : index
    %c0_4 = arith.constant 0 : index
    %11 = vector.load %arg3[%c0_3, %c0_4] : memref<33x1024xf32, #tpu.memory_space<vmem>>, vector<32x768xf32>
    %c32 = arith.constant 32 : index
    %c0_5 = arith.constant 0 : index
    %12 = vector.load %arg3[%c32, %c0_5] : memref<33x1024xf32, #tpu.memory_space<vmem>>, vector<1x768xf32>
    %cst_6 = arith.constant dense<0.000000e+00> : vector<18x768xf32>
    %13 = tpu.matmul %10, %11, %cst_6 {dimension_numbers = #tpu.dot_dimension_numbers<[1], [0], [0], [1], [0, 0, 1, 1], [], []>} : vector<18x32xf32>, vector<32x768xf32>, vector<18x768xf32> -> vector<18x768xf32>
    %14 = vector.broadcast %12 : vector<1x768xf32> to vector<18x768xf32>
    %15 = arith.addf %13, %14 : vector<18x768xf32>
    %16 = vector.extract_strided_slice %15 {offsets = [0, 0], sizes = [18, 256], strides = [1, 1]} : vector<18x768xf32> to vector<18x256xf32>
    %17 = vector.extract_strided_slice %15 {offsets = [0, 256], sizes = [18, 256], strides = [1, 1]} : vector<18x768xf32> to vector<18x256xf32>
    %18 = vector.extract_strided_slice %15 {offsets = [0, 512], sizes = [18, 256], strides = [1, 1]} : vector<18x768xf32> to vector<18x256xf32>
    %c0_7 = arith.constant 0 : index
    %c0_8 = arith.constant 0 : index
    %19 = vector.load %arg1[%c0_7, %c0_8] : memref<2x8xf32, #tpu.memory_space<vmem>>, vector<2x8xf32>
    %20 = vector.extract_strided_slice %16 {offsets = [16, 0], sizes = [1, 256], strides = [1, 1]} : vector<18x256xf32> to vector<1x256xf32>
    %21 = vector.extract_strided_slice %17 {offsets = [0, 0], sizes = [8, 256], strides = [1, 1]} : vector<18x256xf32> to vector<8x256xf32>
    %22 = vector.extract_strided_slice %18 {offsets = [0, 0], sizes = [8, 256], strides = [1, 1]} : vector<18x256xf32> to vector<8x256xf32>
    %23 = vector.extract_strided_slice %19 {offsets = [0, 0], sizes = [1, 8], strides = [1, 1]} : vector<2x8xf32> to vector<1x8xf32>
    %24 = vector.extract_strided_slice %20 {offsets = [0, 0], sizes = [1, 128], strides = [1, 1]} : vector<1x256xf32> to vector<1x128xf32>
    %25 = vector.extract_strided_slice %21 {offsets = [0, 0], sizes = [8, 128], strides = [1, 1]} : vector<8x256xf32> to vector<8x128xf32>
    %cst_9 = arith.constant dense<0.000000e+00> : vector<1x8xf32>
    %26 = tpu.matmul %24, %25, %cst_9 {dimension_numbers = #tpu.dot_dimension_numbers<[1], [1], [0], [0], [0, 0, 1, 0], [], []>} : vector<1x128xf32>, vector<8x128xf32>, vector<1x8xf32> -> vector<1x8xf32>
    %27 = arith.addf %26, %23 : vector<1x8xf32>
    %cst_10 = arith.constant dense<0xFF800000> : vector<1xf32>
    %28 = vector.multi_reduction <maximumf>, %27, %cst_10 [1] : vector<1x8xf32> to vector<1xf32>
    %29 = vector.shape_cast %28 : vector<1xf32> to vector<1x1xf32>
    %30 = vector.broadcast %29 : vector<1x1xf32> to vector<1x8xf32>
    %31 = arith.subf %27, %30 : vector<1x8xf32>
    %32 = math.exp %31 : vector<1x8xf32>
    %cst_11 = arith.constant dense<0.000000e+00> : vector<1xf32>
    %33 = vector.multi_reduction <add>, %32, %cst_11 [1] : vector<1x8xf32> to vector<1xf32>
    %34 = vector.shape_cast %33 : vector<1xf32> to vector<1x1xf32>
    %35 = tpu.reciprocal %34 {approx = true} : vector<1x1xf32> -> vector<1x1xf32>
    %36 = vector.broadcast %35 : vector<1x1xf32> to vector<1x8xf32>
    %37 = arith.mulf %32, %36 : vector<1x8xf32>
    %38 = vector.extract_strided_slice %22 {offsets = [0, 0], sizes = [8, 128], strides = [1, 1]} : vector<8x256xf32> to vector<8x128xf32>
    %cst_12 = arith.constant dense<0.000000e+00> : vector<1x128xf32>
    %39 = tpu.matmul %37, %38, %cst_12 {dimension_numbers = #tpu.dot_dimension_numbers<[1], [0], [0], [1], [0, 0, 1, 1], [], []>} : vector<1x8xf32>, vector<8x128xf32>, vector<1x128xf32> -> vector<1x128xf32>
    %40 = vector.extract_strided_slice %20 {offsets = [0, 128], sizes = [1, 128], strides = [1, 1]} : vector<1x256xf32> to vector<1x128xf32>
    %41 = vector.extract_strided_slice %21 {offsets = [0, 128], sizes = [8, 128], strides = [1, 1]} : vector<8x256xf32> to vector<8x128xf32>
    %cst_13 = arith.constant dense<0.000000e+00> : vector<1x8xf32>
    %42 = tpu.matmul %40, %41, %cst_13 {dimension_numbers = #tpu.dot_dimension_numbers<[1], [1], [0], [0], [0, 0, 1, 0], [], []>} : vector<1x128xf32>, vector<8x128xf32>, vector<1x8xf32> -> vector<1x8xf32>
    %43 = arith.addf %42, %23 : vector<1x8xf32>
    %cst_14 = arith.constant dense<0xFF800000> : vector<1xf32>
    %44 = vector.multi_reduction <maximumf>, %43, %cst_14 [1] : vector<1x8xf32> to vector<1xf32>
    %45 = vector.shape_cast %44 : vector<1xf32> to vector<1x1xf32>
    %46 = vector.broadcast %45 : vector<1x1xf32> to vector<1x8xf32>
    %47 = arith.subf %43, %46 : vector<1x8xf32>
    %48 = math.exp %47 : vector<1x8xf32>
    %cst_15 = arith.constant dense<0.000000e+00> : vector<1xf32>
    %49 = vector.multi_reduction <add>, %48, %cst_15 [1] : vector<1x8xf32> to vector<1xf32>
    %50 = vector.shape_cast %49 : vector<1xf32> to vector<1x1xf32>
    %51 = tpu.reciprocal %50 {approx = true} : vector<1x1xf32> -> vector<1x1xf32>
    %52 = vector.broadcast %51 : vector<1x1xf32> to vector<1x8xf32>
    %53 = arith.mulf %48, %52 : vector<1x8xf32>
    %54 = vector.extract_strided_slice %22 {offsets = [0, 128], sizes = [8, 128], strides = [1, 1]} : vector<8x256xf32> to vector<8x128xf32>
    %cst_16 = arith.constant dense<0.000000e+00> : vector<1x128xf32>
    %55 = tpu.matmul %53, %54, %cst_16 {dimension_numbers = #tpu.dot_dimension_numbers<[1], [0], [0], [1], [0, 0, 1, 1], [], []>} : vector<1x8xf32>, vector<8x128xf32>, vector<1x128xf32> -> vector<1x128xf32>
    %56 = tpu.concatenate %39, %55 in 1 : vector<1x128xf32>, vector<1x128xf32> -> vector<1x256xf32>
    %57 = vector.extract_strided_slice %16 {offsets = [17, 0], sizes = [1, 256], strides = [1, 1]} : vector<18x256xf32> to vector<1x256xf32>
    %58 = vector.extract_strided_slice %17 {offsets = [8, 0], sizes = [8, 256], strides = [1, 1]} : vector<18x256xf32> to vector<8x256xf32>
    %59 = vector.extract_strided_slice %18 {offsets = [8, 0], sizes = [8, 256], strides = [1, 1]} : vector<18x256xf32> to vector<8x256xf32>
    %60 = vector.extract_strided_slice %19 {offsets = [1, 0], sizes = [1, 8], strides = [1, 1]} : vector<2x8xf32> to vector<1x8xf32>
    %61 = vector.extract_strided_slice %57 {offsets = [0, 0], sizes = [1, 128], strides = [1, 1]} : vector<1x256xf32> to vector<1x128xf32>
    %62 = vector.extract_strided_slice %58 {offsets = [0, 0], sizes = [8, 128], strides = [1, 1]} : vector<8x256xf32> to vector<8x128xf32>
    %cst_17 = arith.constant dense<0.000000e+00> : vector<1x8xf32>
    %63 = tpu.matmul %61, %62, %cst_17 {dimension_numbers = #tpu.dot_dimension_numbers<[1], [1], [0], [0], [0, 0, 1, 0], [], []>} : vector<1x128xf32>, vector<8x128xf32>, vector<1x8xf32> -> vector<1x8xf32>
    %64 = arith.addf %63, %60 : vector<1x8xf32>
    %cst_18 = arith.constant dense<0xFF800000> : vector<1xf32>
    %65 = vector.multi_reduction <maximumf>, %64, %cst_18 [1] : vector<1x8xf32> to vector<1xf32>
    %66 = vector.shape_cast %65 : vector<1xf32> to vector<1x1xf32>
    %67 = vector.broadcast %66 : vector<1x1xf32> to vector<1x8xf32>
    %68 = arith.subf %64, %67 : vector<1x8xf32>
    %69 = math.exp %68 : vector<1x8xf32>
    %cst_19 = arith.constant dense<0.000000e+00> : vector<1xf32>
    %70 = vector.multi_reduction <add>, %69, %cst_19 [1] : vector<1x8xf32> to vector<1xf32>
    %71 = vector.shape_cast %70 : vector<1xf32> to vector<1x1xf32>
    %72 = tpu.reciprocal %71 {approx = true} : vector<1x1xf32> -> vector<1x1xf32>
    %73 = vector.broadcast %72 : vector<1x1xf32> to vector<1x8xf32>
    %74 = arith.mulf %69, %73 : vector<1x8xf32>
    %75 = vector.extract_strided_slice %59 {offsets = [0, 0], sizes = [8, 128], strides = [1, 1]} : vector<8x256xf32> to vector<8x128xf32>
    %cst_20 = arith.constant dense<0.000000e+00> : vector<1x128xf32>
    %76 = tpu.matmul %74, %75, %cst_20 {dimension_numbers = #tpu.dot_dimension_numbers<[1], [0], [0], [1], [0, 0, 1, 1], [], []>} : vector<1x8xf32>, vector<8x128xf32>, vector<1x128xf32> -> vector<1x128xf32>
    %77 = vector.extract_strided_slice %57 {offsets = [0, 128], sizes = [1, 128], strides = [1, 1]} : vector<1x256xf32> to vector<1x128xf32>
    %78 = vector.extract_strided_slice %58 {offsets = [0, 128], sizes = [8, 128], strides = [1, 1]} : vector<8x256xf32> to vector<8x128xf32>
    %cst_21 = arith.constant dense<0.000000e+00> : vector<1x8xf32>
    %79 = tpu.matmul %77, %78, %cst_21 {dimension_numbers = #tpu.dot_dimension_numbers<[1], [1], [0], [0], [0, 0, 1, 0], [], []>} : vector<1x128xf32>, vector<8x128xf32>, vector<1x8xf32> -> vector<1x8xf32>
    %80 = arith.addf %79, %60 : vector<1x8xf32>
    %cst_22 = arith.constant dense<0xFF800000> : vector<1xf32>
    %81 = vector.multi_reduction <maximumf>, %80, %cst_22 [1] : vector<1x8xf32> to vector<1xf32>
    %82 = vector.shape_cast %81 : vector<1xf32> to vector<1x1xf32>
    %83 = vector.broadcast %82 : vector<1x1xf32> to vector<1x8xf32>
    %84 = arith.subf %80, %83 : vector<1x8xf32>
    %85 = math.exp %84 : vector<1x8xf32>
    %cst_23 = arith.constant dense<0.000000e+00> : vector<1xf32>
    %86 = vector.multi_reduction <add>, %85, %cst_23 [1] : vector<1x8xf32> to vector<1xf32>
    %87 = vector.shape_cast %86 : vector<1xf32> to vector<1x1xf32>
    %88 = tpu.reciprocal %87 {approx = true} : vector<1x1xf32> -> vector<1x1xf32>
    %89 = vector.broadcast %88 : vector<1x1xf32> to vector<1x8xf32>
    %90 = arith.mulf %85, %89 : vector<1x8xf32>
    %91 = vector.extract_strided_slice %59 {offsets = [0, 128], sizes = [8, 128], strides = [1, 1]} : vector<8x256xf32> to vector<8x128xf32>
    %cst_24 = arith.constant dense<0.000000e+00> : vector<1x128xf32>
    %92 = tpu.matmul %90, %91, %cst_24 {dimension_numbers = #tpu.dot_dimension_numbers<[1], [0], [0], [1], [0, 0, 1, 1], [], []>} : vector<1x8xf32>, vector<8x128xf32>, vector<1x128xf32> -> vector<1x128xf32>
    %93 = tpu.concatenate %76, %92 in 1 : vector<1x128xf32>, vector<1x128xf32> -> vector<1x256xf32>
    %94 = tpu.concatenate %56, %93 in 0 : vector<1x256xf32>, vector<1x256xf32> -> vector<2x256xf32>
    %c384 = arith.constant 384 : index
    %c0_25 = arith.constant 0 : index
    %95 = vector.load %arg4[%c384, %c0_25] : memref<392x32xf32, #tpu.memory_space<vmem>>, vector<8x32xf32>
    %96 = vector.extract_strided_slice %95 {offsets = [0, 0], sizes = [1, 32], strides = [1, 1]} : vector<8x32xf32> to vector<1x32xf32>
    %97 = vector.extract_strided_slice %95 {offsets = [1, 0], sizes = [1, 32], strides = [1, 1]} : vector<8x32xf32> to vector<1x32xf32>
    %98 = vector.extract_strided_slice %95 {offsets = [2, 0], sizes = [1, 32], strides = [1, 1]} : vector<8x32xf32> to vector<1x32xf32>
    %99 = vector.extract_strided_slice %95 {offsets = [3, 0], sizes = [1, 32], strides = [1, 1]} : vector<8x32xf32> to vector<1x32xf32>
    %100 = vector.extract_strided_slice %95 {offsets = [4, 0], sizes = [1, 32], strides = [1, 1]} : vector<8x32xf32> to vector<1x32xf32>
    %101 = vector.extract_strided_slice %95 {offsets = [5, 0], sizes = [1, 32], strides = [1, 1]} : vector<8x32xf32> to vector<1x32xf32>
    %102 = vector.extract_strided_slice %10 {offsets = [16, 0], sizes = [2, 32], strides = [1, 1]} : vector<18x32xf32> to vector<2x32xf32>
    %c0_26 = arith.constant 0 : index
    %c0_27 = arith.constant 0 : index
    %103 = vector.load %arg4[%c0_26, %c0_27] : memref<392x32xf32, #tpu.memory_space<vmem>>, vector<256x32xf32>
    %cst_28 = arith.constant dense<0.000000e+00> : vector<2x32xf32>
    %104 = tpu.matmul %94, %103, %cst_28 {dimension_numbers = #tpu.dot_dimension_numbers<[1], [0], [0], [1], [0, 0, 1, 1], [], []>} : vector<2x256xf32>, vector<256x32xf32>, vector<2x32xf32> -> vector<2x32xf32>
    %105 = vector.broadcast %96 : vector<1x32xf32> to vector<2x32xf32>
    %106 = arith.addf %104, %105 : vector<2x32xf32>
    %107 = arith.addf %102, %106 : vector<2x32xf32>
    %cst_29 = arith.constant dense<0.000000e+00> : vector<2xf32>
    %108 = vector.multi_reduction <add>, %107, %cst_29 [1] : vector<2x32xf32> to vector<2xf32>
    %109 = vector.shape_cast %108 : vector<2xf32> to vector<2x1xf32>
    %cst_30 = arith.constant 3.200000e+01 : f32
    %110 = vector.broadcast %cst_30 : f32 to vector<2x1xf32>
    %111 = arith.divf %109, %110 : vector<2x1xf32>
    %112 = vector.broadcast %111 : vector<2x1xf32> to vector<2x32xf32>
    %113 = arith.subf %107, %112 : vector<2x32xf32>
    %114 = arith.mulf %113, %113 : vector<2x32xf32>
    %cst_31 = arith.constant dense<0.000000e+00> : vector<2xf32>
    %115 = vector.multi_reduction <add>, %114, %cst_31 [1] : vector<2x32xf32> to vector<2xf32>
    %116 = vector.shape_cast %115 : vector<2xf32> to vector<2x1xf32>
    %cst_32 = arith.constant 3.200000e+01 : f32
    %117 = vector.broadcast %cst_32 : f32 to vector<2x1xf32>
    %118 = arith.divf %116, %117 : vector<2x1xf32>
    %cst_33 = arith.constant 9.99999974E-6 : f32
    %119 = vector.broadcast %cst_33 : f32 to vector<2x1xf32>
    %120 = arith.addf %118, %119 : vector<2x1xf32>
    %121 = math.rsqrt %120 : vector<2x1xf32>
    %122 = vector.broadcast %121 : vector<2x1xf32> to vector<2x32xf32>
    %123 = arith.mulf %113, %122 : vector<2x32xf32>
    %124 = vector.broadcast %98 : vector<1x32xf32> to vector<2x32xf32>
    %125 = arith.mulf %123, %124 : vector<2x32xf32>
    %126 = vector.broadcast %99 : vector<1x32xf32> to vector<2x32xf32>
    %127 = arith.addf %125, %126 : vector<2x32xf32>
    %c0_34 = arith.constant 0 : index
    %c768 = arith.constant 768 : index
    %128 = vector.load %arg3[%c0_34, %c768] : memref<33x1024xf32, #tpu.memory_space<vmem>>, vector<32x128xf32>
    %cst_35 = arith.constant dense<0.000000e+00> : vector<2x128xf32>
    %129 = tpu.matmul %127, %128, %cst_35 {dimension_numbers = #tpu.dot_dimension_numbers<[1], [0], [0], [1], [0, 0, 1, 1], [], []>} : vector<2x32xf32>, vector<32x128xf32>, vector<2x128xf32> -> vector<2x128xf32>
    %c32_36 = arith.constant 32 : index
    %c768_37 = arith.constant 768 : index
    %130 = vector.load %arg3[%c32_36, %c768_37] : memref<33x1024xf32, #tpu.memory_space<vmem>>, vector<1x128xf32>
    %131 = vector.broadcast %130 : vector<1x128xf32> to vector<2x128xf32>
    %132 = arith.addf %129, %131 : vector<2x128xf32>
    %133 = arith.mulf %132, %132 : vector<2x128xf32>
    %134 = arith.mulf %132, %133 : vector<2x128xf32>
    %cst_38 = arith.constant 4.471500e-02 : f32
    %135 = vector.broadcast %cst_38 : f32 to vector<2x128xf32>
    %136 = arith.mulf %135, %134 : vector<2x128xf32>
    %137 = arith.addf %132, %136 : vector<2x128xf32>
    %cst_39 = arith.constant 0.797884583 : f32
    %138 = vector.broadcast %cst_39 : f32 to vector<2x128xf32>
    %139 = arith.mulf %138, %137 : vector<2x128xf32>
    %140 = math.tanh %139 : vector<2x128xf32>
    %cst_40 = arith.constant 1.000000e+00 : f32
    %141 = vector.broadcast %cst_40 : f32 to vector<2x128xf32>
    %142 = arith.addf %141, %140 : vector<2x128xf32>
    %cst_41 = arith.constant 5.000000e-01 : f32
    %143 = vector.broadcast %cst_41 : f32 to vector<2x128xf32>
    %144 = arith.mulf %143, %142 : vector<2x128xf32>
    %145 = arith.mulf %132, %144 : vector<2x128xf32>
    %c256 = arith.constant 256 : index
    %c0_42 = arith.constant 0 : index
    %146 = vector.load %arg4[%c256, %c0_42] : memref<392x32xf32, #tpu.memory_space<vmem>>, vector<128x32xf32>
    %cst_43 = arith.constant dense<0.000000e+00> : vector<2x32xf32>
    %147 = tpu.matmul %145, %146, %cst_43 {dimension_numbers = #tpu.dot_dimension_numbers<[1], [0], [0], [1], [0, 0, 1, 1], [], []>} : vector<2x128xf32>, vector<128x32xf32>, vector<2x32xf32> -> vector<2x32xf32>
    %148 = vector.broadcast %97 : vector<1x32xf32> to vector<2x32xf32>
    %149 = arith.addf %147, %148 : vector<2x32xf32>
    %150 = arith.addf %127, %149 : vector<2x32xf32>
    %cst_44 = arith.constant dense<0.000000e+00> : vector<2xf32>
    %151 = vector.multi_reduction <add>, %150, %cst_44 [1] : vector<2x32xf32> to vector<2xf32>
    %152 = vector.shape_cast %151 : vector<2xf32> to vector<2x1xf32>
    %cst_45 = arith.constant 3.200000e+01 : f32
    %153 = vector.broadcast %cst_45 : f32 to vector<2x1xf32>
    %154 = arith.divf %152, %153 : vector<2x1xf32>
    %155 = vector.broadcast %154 : vector<2x1xf32> to vector<2x32xf32>
    %156 = arith.subf %150, %155 : vector<2x32xf32>
    %157 = arith.mulf %156, %156 : vector<2x32xf32>
    %cst_46 = arith.constant dense<0.000000e+00> : vector<2xf32>
    %158 = vector.multi_reduction <add>, %157, %cst_46 [1] : vector<2x32xf32> to vector<2xf32>
    %159 = vector.shape_cast %158 : vector<2xf32> to vector<2x1xf32>
    %cst_47 = arith.constant 3.200000e+01 : f32
    %160 = vector.broadcast %cst_47 : f32 to vector<2x1xf32>
    %161 = arith.divf %159, %160 : vector<2x1xf32>
    %cst_48 = arith.constant 9.99999974E-6 : f32
    %162 = vector.broadcast %cst_48 : f32 to vector<2x1xf32>
    %163 = arith.addf %161, %162 : vector<2x1xf32>
    %164 = math.rsqrt %163 : vector<2x1xf32>
    %165 = vector.broadcast %164 : vector<2x1xf32> to vector<2x32xf32>
    %166 = arith.mulf %156, %165 : vector<2x32xf32>
    %167 = vector.broadcast %100 : vector<1x32xf32> to vector<2x32xf32>
    %168 = arith.mulf %166, %167 : vector<2x32xf32>
    %169 = vector.broadcast %101 : vector<1x32xf32> to vector<2x32xf32>
    %170 = arith.addf %168, %169 : vector<2x32xf32>
    %c0_49 = arith.constant 0 : index
    %c896 = arith.constant 896 : index
    %171 = vector.load %arg3[%c0_49, %c896] : memref<33x1024xf32, #tpu.memory_space<vmem>>, vector<32x128xf32>
    %cst_50 = arith.constant dense<0.000000e+00> : vector<2x128xf32>
    %172 = tpu.matmul %170, %171, %cst_50 {dimension_numbers = #tpu.dot_dimension_numbers<[1], [0], [0], [1], [0, 0, 1, 1], [], []>} : vector<2x32xf32>, vector<32x128xf32>, vector<2x128xf32> -> vector<2x128xf32>
    %c32_51 = arith.constant 32 : index
    %c896_52 = arith.constant 896 : index
    %173 = vector.load %arg3[%c32_51, %c896_52] : memref<33x1024xf32, #tpu.memory_space<vmem>>, vector<1x128xf32>
    %174 = vector.broadcast %173 : vector<1x128xf32> to vector<2x128xf32>
    %175 = arith.addf %172, %174 : vector<2x128xf32>
    %c0_53 = arith.constant 0 : index
    %c0_54 = arith.constant 0 : index
    %176 = vector.load %arg5[%c0_53, %c0_54] : memref<2x128xf32, #tpu.memory_space<vmem>>, vector<2x128xf32>
    tpu.vector_store %arg5[%c0_53, %c0_54], %175 {strides = array<i32>} : memref<2x128xf32, #tpu.memory_space<vmem>>, vector<2x128xf32>,
    return
  }
}

</mosaic_0001>

<llo_original>
// kernel: emotion_embedding_forward.1
$region0: #{emotion_embedding_forward.1}
  #allocation0 [shape = 'u32[]', space=smem, size = 0x4, offset = 0x4, fixed_abs, tag = 'smem constant byte address 0x4 - core index']
  #allocation1 [shape = 'u32[144,128]{1,0:T(1,128)}', space=vmem, size = 0x12000, scoped, tag = 'internal scratch']
  %s0 = inlined_call_operand.vmem [shape: s32[18,1], index: 0, kind: input, shape index: {}]
  %s1 = inlined_call_operand.vmem [shape: f32[2,8], index: 1, kind: input, shape index: {}]
  %s2 = inlined_call_operand.vmem [shape: f32[74,32], index: 2, kind: input, shape index: {}]
  %s3 = inlined_call_operand.vmem [shape: f32[33,1024], index: 3, kind: input, shape index: {}]
  %s4 = inlined_call_operand.vmem [shape: f32[392,32], index: 4, kind: input, shape index: {}]
  %s5 = inlined_call_operand.hbm [shape: f32[2,128], index: 5, kind: output, shape index: {}]
  %s6 = sld [smem:[#allocation0]]
  $region30: #{emotion_embedding_forward.1} parent=0
    _
  %s8 = ssub.s32 1, %s6
  %s9 = scalar_select 0, %s8, %s6
  $region1: #{emotion_embedding_forward.1} parent=0
    #allocation2 [shape = 'u8[1024]{0}', space=vmem, size = 0x400, scoped, tag = 'output window, operand 0, single buffered']
    #allocation3 [shape = 's32[1]{0}', space=sflag, size = 0x4, scoped, tag = 'scoped memory for emotion_embedding_forward.1']
    %10 = vsyncpa [#allocation3], 0
    // Predicated region
    $region2: #{emotion_embedding_forward.1} parent=1 // pred_check
      _
    $region3: #{emotion_embedding_forward.1} parent=1 // pred_check_branch
      %12 = sbr.rel (0) target = $region5
    $region4: #{emotion_embedding_forward.1} parent=1 // pred_region
      _
    $region5: #{emotion_embedding_forward.1} parent=1 // pred_fallthru
      _
    // Predicated region
    $region6: #{emotion_embedding_forward.1} parent=1 // pred_check
      _
    $region7: #{emotion_embedding_forward.1} parent=1 // pred_check_branch
      %14 = sbr.rel (0) target = $region9
    $region8: #{emotion_embedding_forward.1} parent=1 // pred_region
      _
    $region9: #{emotion_embedding_forward.1} parent=1 // pred_fallthru
      _
    // Predicated region
    $region10: #{emotion_embedding_forward.1} parent=1 // pred_check
      _
    $region11: #{emotion_embedding_forward.1} parent=1 // pred_check_branch
      %16 = sbr.rel (0) target = $region13
    $region12: #{emotion_embedding_forward.1} parent=1 // pred_region
      _
    $region13: #{emotion_embedding_forward.1} parent=1 // pred_fallthru
      _
    // Predicated region
    $region14: #{emotion_embedding_forward.1} parent=1 // pred_check
      _
    $region15: #{emotion_embedding_forward.1} parent=1 // pred_check_branch
      %18 = sbr.rel (0) target = $region17
    $region16: #{emotion_embedding_forward.1} parent=1 // pred_region
      _
    $region17: #{emotion_embedding_forward.1} parent=1 // pred_fallthru
      _
    // Predicated region
    $region18: #{emotion_embedding_forward.1} parent=1 // pred_check
      _
    $region19: #{emotion_embedding_forward.1} parent=1 // pred_check_branch
      %20 = sbr.rel (0) target = $region21
    $region20: #{emotion_embedding_forward.1} parent=1 // pred_region
      _
    $region21: #{emotion_embedding_forward.1} parent=1 // pred_fallthru
      _
    %v21 = vld [vmem:[%s0] sm:$0xff]
    %v22 = vld [vmem:[%s0 + $0x8] sm:$0xff]
    %v23 = vld [vmem:[%s0 + $0x10] sm:$0x3]
    %v24 = vlaneseq
    %v25 = vand.u32 %v24, 127
    %26 = vset.pattern.permute.xlu0 0
    %27 = vperm.xlu0 %26, %v21
    %v28 = vpop.permute.xlu0 %27
    %29 = vset.pattern.permute.xlu0 0
    %30 = vperm.xlu0 %29, %v22
    %v31 = vpop.permute.xlu0 %30
    %32 = vset.pattern.permute.xlu0 0
    %33 = vperm.xlu0 %32, %v23
    %v34 = vpop.permute.xlu0 %33
    %vm35 = vcmp.eq.s32.totalorder %v25, %v28
    %vm36 = vcmp.eq.s32.totalorder %v25, %v31
    %vm37 = vcmp.eq.s32.totalorder %v25, %v34
    %v38 = vsel %vm35, 1, 0
    %v39 = vsel %vm36, 1, 0
    %v40 = vsel %vm37, 1, 0
    %v41 = vcvt.s32.f32 %v38
    %v42 = vcvt.s32.f32 %v39
    %v43 = vcvt.s32.f32 %v40
    %v44 = vld [vmem:[%s2] sm:$0xff]
    %v45 = vld [vmem:[%s2 + $0x8] sm:$0xff]
    %v46 = vld [vmem:[%s2 + $0x10] sm:$0xff]
    %v47 = vld [vmem:[%s2 + $0x18] sm:$0xff]
    %v48 = vld [vmem:[%s2 + $0x20] sm:$0xff]
    %v49 = vld [vmem:[%s2 + $0x28] sm:$0xff]
    %v50 = vld [vmem:[%s2 + $0x30] sm:$0xff]
    %v51 = vld [vmem:[%s2 + $0x38] sm:$0xff]
    %v52 = vld [vmem:[%s2 + $0x40] sm:$0xff]
    %v53 = vld [vmem:[%s2 + $0x48] sm:$0x3]
    %vm54 = vcmask 457728
    %v56 = vsel %vm54, %v41, 0
    %v59 = vsel %vm54, %v42, 0
    %v62 = vsel %vm54, %v43, 0
    %64 = vmatprep.subr.mxu0 0.0
    %65 = vmatpush1.msra.mxu0 %v44
    %66 = vmatprep.subr.mxu0 0.0
    %67 = vmatpush1.msra.mxu0 %v45
    %68 = vmatprep.subr.mxu0 0.0
    %69 = vmatpush1.msra.mxu0 %v46
    %70 = vmatprep.subr.mxu0 0.0
    %71 = vmatpush1.msra.mxu0 %v47
    %72 = vmatprep.subr.mxu0 0.0
    %73 = vmatpush1.msra.mxu0 %v48
    %74 = vmatprep.subr.mxu0 0.0
    %75 = vmatpush1.msra.mxu0 %v49
    %76 = vmatprep.subr.mxu0 0.0
    %77 = vmatpush1.msra.mxu0 %v50
    %78 = vmatprep.subr.mxu0 0.0
    %79 = vmatpush1.msra.mxu0 0.0
    %80 = vmatprep.subr.mxu0 0.0
    %81 = vmatpush1.msra.mxu0 0.0
    %82 = vmatprep.subr.mxu0 0.0
    %83 = vmatpush1.msra.mxu0 0.0
    %84 = vmatprep.subr.mxu0 0.0
    %85 = vmatpush1.msra.mxu0 0.0
    %86 = vmatprep.subr.mxu0 0.0
    %87 = vmatpush1.msra.mxu0 0.0
    %88 = vmatprep.subr.mxu0 0.0
    %89 = vmatpush1.msra.mxu0 0.0
    %90 = vmatprep.subr.mxu0 0.0
    %91 = vmatpush1.msra.mxu0 0.0
    %92 = vmatprep.subr.mxu0 0.0
    %93 = vmatpush1.msra.mxu0 0.0
    %94 = vmatprep.subr.mxu0 0.0
    %95 = vmatpush1.msra.mxu0 0.0
    %96 = vmatprep.subr.mxu0 0.0
    %97 = vmatpush1.msra.mxu0 0.0
    %98 = vmatprep.subr.mxu0 0.0
    %99 = vmatpush1.msra.mxu0 0.0
    %100 = vmatprep.subr.mxu0 0.0
    %101 = vmatpush1.msra.mxu0 0.0
    %102 = vmatprep.subr.mxu0 0.0
    %103 = vmatpush1.msra.mxu0 0.0
    %104 = vmatprep.subr.mxu0 0.0
    %105 = vmatpush1.msra.mxu0 0.0
    %106 = vmatprep.subr.mxu0 0.0
    %107 = vmatpush1.msra.mxu0 0.0
    %108 = vmatprep.subr.mxu0 0.0
    %109 = vmatpush1.msra.mxu0 0.0
    %110 = vmatprep.subr.mxu0 0.0
    %111 = vmatpush1.msra.mxu0 0.0
    %112 = vmatprep.subr.mxu0 0.0
    %113 = vmatpush1.msra.mxu0 0.0
    %114 = vmatprep.subr.mxu0 0.0
    %115 = vmatpush1.msra.mxu0 0.0
    %116 = vmatprep.subr.mxu0 0.0
    %117 = vmatpush1.msra.mxu0 0.0
    %118 = vmatprep.subr.mxu0 0.0
    %119 = vmatpush1.msra.mxu0 0.0
    %120 = vmatprep.subr.mxu0 0.0
    %121 = vmatpush1.msra.mxu0 0.0
    %122 = vmatprep.subr.mxu0 0.0
    %123 = vmatpush1.msra.mxu0 0.0
    %124 = vmatprep.subr.mxu0 0.0
    %125 = vmatpush1.msra.mxu0 0.0
    %126 = vmatprep.subr.mxu0 0.0
    %127 = vmatpush1.msra.mxu0 0.0
    %128 = vmatprep.mubr.f32.mxu0 0.0
    %129 = vmatmul.mubr.f32.gmra.mrb[0].mxu0 %v56
    %v130 = vpop.f32.mrb[0].mxu0
    %v131 = vadd.f32 %v51, %v130
    %v132 = vpop.f32.mrb[0].mxu0
    %133 = vmatprep.mubr.f32.mxu0 0.0
    %134 = vmatmul.mubr.f32.gmra.mrb[0].mxu0 %v59
    %v135 = vpop.f32.mrb[0].mxu0
    %v136 = vadd.f32 %v52, %v135
    %v137 = vpop.f32.mrb[0].mxu0
    %138 = vmatprep.mubr.f32.mxu0 0.0
    %139 = vmatmul.mubr.f32.gmra.mrb[0].mxu0 %v62
    %v140 = vpop.f32.mrb[0].mxu0
    %v141 = vadd.f32 %v53, %v140
    %v142 = vpop.f32.mrb[0].mxu0
    %143 = vdwg.mxu0
    %v144 = vld [vmem:[%s3] sm:$0xff]
    %v145 = vld [vmem:[%s3 + $0x8] sm:$0xff]
    %v146 = vld [vmem:[%s3 + $0x10] sm:$0xff]
    %v147 = vld [vmem:[%s3 + $0x18] sm:$0xff]
    %v148 = vld [vmem:[%s3 + $0x20] sm:$0xff]
    %v149 = vld [vmem:[%s3 + $0x28] sm:$0xff]
    %v150 = vld [vmem:[%s3 + $0x40] sm:$0xff]
    %v151 = vld [vmem:[%s3 + $0x48] sm:$0xff]
    %v152 = vld [vmem:[%s3 + $0x50] sm:$0xff]
    %v153 = vld [vmem:[%s3 + $0x58] sm:$0xff]
    %v154 = vld [vmem:[%s3 + $0x60] sm:$0xff]
    %v155 = vld [vmem:[%s3 + $0x68] sm:$0xff]
    %v156 = vld [vmem:[%s3 + $0x80] sm:$0xff]
    %v157 = vld [vmem:[%s3 + $0x88] sm:$0xff]
    %v158 = vld [vmem:[%s3 + $0x90] sm:$0xff]
    %v159 = vld [vmem:[%s3 + $0x98] sm:$0xff]
    %v160 = vld [vmem:[%s3 + $0xa0] sm:$0xff]
    %v161 = vld [vmem:[%s3 + $0xa8] sm:$0xff]
    %v162 = vld [vmem:[%s3 + $0xc0] sm:$0xff]
    %v163 = vld [vmem:[%s3 + $0xc8] sm:$0xff]
    %v164 = vld [vmem:[%s3 + $0xd0] sm:$0xff]
    %v165 = vld [vmem:[%s3 + $0xd8] sm:$0xff]
    %v166 = vld [vmem:[%s3 + $0xe0] sm:$0xff]
    %v167 = vld [vmem:[%s3 + $0xe8] sm:$0xff]
    %s168 = scalar_lea.vmem %s3, 256
    %v169 = vld [vmem:[%s168] ss:$8 sm:$0xf]
    %v170 = vld [vmem:[%s168] ss:$8 sm:$0x30]
    %v171 = vor.u32 %v169, %v170
    %v173 = vlaneseq
    %v174 = vshrl.u32 %v173, 7
    %v175 = vsub.s32 0, %v174
    %v176 = vrot.slane %v171, %v175
    %v177 = vlaneseq
    %v178 = vshrl.u32 %v177, 7
    %v179 = vsub.s32 1, %v178
    %v180 = vrot.slane %v171, %v179
    %v181 = vlaneseq
    %v182 = vshrl.u32 %v181, 7
    %v183 = vsub.s32 2, %v182
    %v184 = vrot.slane %v171, %v183
    %v185 = vlaneseq
    %v186 = vshrl.u32 %v185, 7
    %v187 = vsub.s32 3, %v186
    %v188 = vrot.slane %v171, %v187
    %v189 = vlaneseq
    %v190 = vshrl.u32 %v189, 7
    %v191 = vsub.s32 4, %v190
    %v192 = vrot.slane %v171, %v191
    %v193 = vlaneseq
    %v194 = vshrl.u32 %v193, 7
    %v195 = vsub.s32 5, %v194
    %v196 = vrot.slane %v171, %v195
    %vm203 = vcmask 261120
    %v205 = vsel %vm203, %v131, 0
    %v208 = vsel %vm203, %v136, 0
    %v211 = vsel %vm203, %v141, 0
    %213 = vmatprep.subr.mxu0 %v145
    %214 = vmatpush1.msra.mxu0 %v144
    %215 = vmatprep.subr.mxu0 %v151
    %216 = vmatpush1.msra.mxu0 %v150
    %217 = vmatprep.subr.mxu0 %v157
    %218 = vmatpush1.msra.mxu0 %v156
    %219 = vmatprep.subr.mxu0 %v163
    %220 = vmatpush1.msra.mxu0 %v162
    %221 = vmatprep.subr.mxu0 0.0
    %222 = vmatpush1.msra.mxu0 0.0
    %223 = vmatprep.subr.mxu0 0.0
    %224 = vmatpush1.msra.mxu0 0.0
    %225 = vmatprep.subr.mxu0 0.0
    %226 = vmatpush1.msra.mxu0 0.0
    %227 = vmatprep.subr.mxu0 0.0
    %228 = vmatpush1.msra.mxu0 0.0
    %229 = vmatprep.subr.mxu0 0.0
    %230 = vmatpush1.msra.mxu0 0.0
    %231 = vmatprep.subr.mxu0 0.0
    %232 = vmatpush1.msra.mxu0 0.0
    %233 = vmatprep.subr.mxu0 0.0
    %234 = vmatpush1.msra.mxu0 0.0
    %235 = vmatprep.subr.mxu0 0.0
    %236 = vmatpush1.msra.mxu0 0.0
    %237 = vmatprep.subr.mxu0 0.0
    %238 = vmatpush1.msra.mxu0 0.0
    %239 = vmatprep.subr.mxu0 0.0
    %240 = vmatpush1.msra.mxu0 0.0
    %241 = vmatprep.subr.mxu0 0.0
    %242 = vmatpush1.msra.mxu0 0.0
    %243 = vmatprep.subr.mxu0 0.0
    %244 = vmatpush1.msra.mxu0 0.0
    %245 = vmatprep.subr.mxu0 0.0
    %246 = vmatpush1.msra.mxu0 0.0
    %247 = vmatprep.subr.mxu0 0.0
    %248 = vmatpush1.msra.mxu0 0.0
    %249 = vmatprep.subr.mxu0 0.0
    %250 = vmatpush1.msra.mxu0 0.0
    %251 = vmatprep.subr.mxu0 0.0
    %252 = vmatpush1.msra.mxu0 0.0
    %253 = vmatprep.subr.mxu0 0.0
    %254 = vmatpush1.msra.mxu0 0.0
    %255 = vmatprep.subr.mxu0 0.0
    %256 = vmatpush1.msra.mxu0 0.0
    %257 = vmatprep.subr.mxu0 0.0
    %258 = vmatpush1.msra.mxu0 0.0
    %259 = vmatprep.subr.mxu0 0.0
    %260 = vmatpush1.msra.mxu0 0.0
    %261 = vmatprep.subr.mxu0 0.0
    %262 = vmatpush1.msra.mxu0 0.0
    %263 = vmatprep.subr.mxu0 0.0
    %264 = vmatpush1.msra.mxu0 0.0
    %265 = vmatprep.subr.mxu0 0.0
    %266 = vmatpush1.msra.mxu0 0.0
    %267 = vmatprep.subr.mxu0 0.0
    %268 = vmatpush1.msra.mxu0 0.0
    %269 = vmatprep.subr.mxu0 0.0
    %270 = vmatpush1.msra.mxu0 0.0
    %271 = vmatprep.subr.mxu0 0.0
    %272 = vmatpush1.msra.mxu0 0.0
    %273 = vmatprep.subr.mxu0 0.0
    %274 = vmatpush1.msra.mxu0 0.0
    %275 = vmatprep.subr.mxu0 0.0
    %276 = vmatpush1.msra.mxu0 0.0
    %277 = vmatprep.mubr.f32.mxu0 0.0
    %278 = vmatmul.mubr.f32.gmra.mrb[0].mxu0 %v205
    %v279 = vpop.f32.mrb[0].mxu0
    %v280 = vpop.f32.mrb[0].mxu0
    %281 = vmatprep.mubr.f32.mxu0 0.0
    %282 = vmatmul.mubr.f32.gmra.mrb[0].mxu0 %v208
    %v283 = vpop.f32.mrb[0].mxu0
    %v284 = vpop.f32.mrb[0].mxu0
    %285 = vmatprep.mubr.f32.mxu0 0.0
    %286 = vmatmul.mubr.f32.gmra.mrb[0].mxu0 %v211
    %v287 = vpop.f32.mrb[0].mxu0
    %v288 = vadd.f32 %v176, %v287
    %v289 = vpop.f32.mrb[0].mxu0
    %v290 = vadd.f32 %v180, %v289
    %291 = vdwg.mxu0
    %292 = vmatprep.subr.mxu0 %v147
    %293 = vmatpush1.msra.mxu0 %v146
    %294 = vmatprep.subr.mxu0 %v153
    %295 = vmatpush1.msra.mxu0 %v152
    %296 = vmatprep.subr.mxu0 %v159
    %297 = vmatpush1.msra.mxu0 %v158
    %298 = vmatprep.subr.mxu0 %v165
    %299 = vmatpush1.msra.mxu0 %v164
    %300 = vmatprep.subr.mxu0 0.0
    %301 = vmatpush1.msra.mxu0 0.0
    %302 = vmatprep.subr.mxu0 0.0
    %303 = vmatpush1.msra.mxu0 0.0
    %304 = vmatprep.subr.mxu0 0.0
    %305 = vmatpush1.msra.mxu0 0.0
    %306 = vmatprep.subr.mxu0 0.0
    %307 = vmatpush1.msra.mxu0 0.0
    %308 = vmatprep.subr.mxu0 0.0
    %309 = vmatpush1.msra.mxu0 0.0
    %310 = vmatprep.subr.mxu0 0.0
    %311 = vmatpush1.msra.mxu0 0.0
    %312 = vmatprep.subr.mxu0 0.0
    %313 = vmatpush1.msra.mxu0 0.0
    %314 = vmatprep.subr.mxu0 0.0
    %315 = vmatpush1.msra.mxu0 0.0
    %316 = vmatprep.subr.mxu0 0.0
    %317 = vmatpush1.msra.mxu0 0.0
    %318 = vmatprep.subr.mxu0 0.0
    %319 = vmatpush1.msra.mxu0 0.0
    %320 = vmatprep.subr.mxu0 0.0
    %321 = vmatpush1.msra.mxu0 0.0
    %322 = vmatprep.subr.mxu0 0.0
    %323 = vmatpush1.msra.mxu0 0.0
    %324 = vmatprep.subr.mxu0 0.0
    %325 = vmatpush1.msra.mxu0 0.0
    %326 = vmatprep.subr.mxu0 0.0
    %327 = vmatpush1.msra.mxu0 0.0
    %328 = vmatprep.subr.mxu0 0.0
    %329 = vmatpush1.msra.mxu0 0.0
    %330 = vmatprep.subr.mxu0 0.0
    %331 = vmatpush1.msra.mxu0 0.0
    %332 = vmatprep.subr.mxu0 0.0
    %333 = vmatpush1.msra.mxu0 0.0
    %334 = vmatprep.subr.mxu0 0.0
    %335 = vmatpush1.msra.mxu0 0.0
    %336 = vmatprep.subr.mxu0 0.0
    %337 = vmatpush1.msra.mxu0 0.0
    %338 = vmatprep.subr.mxu0 0.0
    %339 = vmatpush1.msra.mxu0 0.0
    %340 = vmatprep.subr.mxu0 0.0
    %341 = vmatpush1.msra.mxu0 0.0
    %342 = vmatprep.subr.mxu0 0.0
    %343 = vmatpush1.msra.mxu0 0.0
    %344 = vmatprep.subr.mxu0 0.0
    %345 = vmatpush1.msra.mxu0 0.0
    %346 = vmatprep.subr.mxu0 0.0
    %347 = vmatpush1.msra.mxu0 0.0
    %348 = vmatprep.subr.mxu0 0.0
    %349 = vmatpush1.msra.mxu0 0.0
    %350 = vmatprep.subr.mxu0 0.0
    %351 = vmatpush1.msra.mxu0 0.0
    %352 = vmatprep.subr.mxu0 0.0
    %353 = vmatpush1.msra.mxu0 0.0
    %354 = vmatprep.subr.mxu0 0.0
    %355 = vmatpush1.msra.mxu0 0.0
    %356 = vmatprep.mubr.f32.mxu0 0.0
    %357 = vmatmul.mubr.f32.gmra.mrb[0].mxu0 %v205
    %v358 = vpop.f32.mrb[0].mxu0
    %v359 = vadd.f32 %v184, %v358
    %v360 = vpop.f32.mrb[0].mxu0
    %v361 = vadd.f32 %v188, %v360
    %362 = vmatprep.mubr.f32.mxu0 0.0
    %363 = vmatmul.mubr.f32.gmra.mrb[0].mxu0 %v208
    %v364 = vpop.f32.mrb[0].mxu0
    %v365 = vadd.f32 %v184, %v364
    %v366 = vpop.f32.mrb[0].mxu0
    %v367 = vadd.f32 %v188, %v366
    %368 = vmatprep.mubr.f32.mxu0 0.0
    %369 = vmatmul.mubr.f32.gmra.mrb[0].mxu0 %v211
    %v370 = vpop.f32.mrb[0].mxu0
    %v371 = vpop.f32.mrb[0].mxu0
    %372 = vdwg.mxu0
    %373 = vmatprep.subr.mxu0 %v149
    %374 = vmatpush1.msra.mxu0 %v148
    %375 = vmatprep.subr.mxu0 %v155
    %376 = vmatpush1.msra.mxu0 %v154
    %377 = vmatprep.subr.mxu0 %v161
    %378 = vmatpush1.msra.mxu0 %v160
    %379 = vmatprep.subr.mxu0 %v167
    %380 = vmatpush1.msra.mxu0 %v166
    %381 = vmatprep.subr.mxu0 0.0
    %382 = vmatpush1.msra.mxu0 0.0
    %383 = vmatprep.subr.mxu0 0.0
    %384 = vmatpush1.msra.mxu0 0.0
    %385 = vmatprep.subr.mxu0 0.0
    %386 = vmatpush1.msra.mxu0 0.0
    %387 = vmatprep.subr.mxu0 0.0
    %388 = vmatpush1.msra.mxu0 0.0
    %389 = vmatprep.subr.mxu0 0.0
    %390 = vmatpush1.msra.mxu0 0.0
    %391 = vmatprep.subr.mxu0 0.0
    %392 = vmatpush1.msra.mxu0 0.0
    %393 = vmatprep.subr.mxu0 0.0
    %394 = vmatpush1.msra.mxu0 0.0
    %395 = vmatprep.subr.mxu0 0.0
    %396 = vmatpush1.msra.mxu0 0.0
    %397 = vmatprep.subr.mxu0 0.0
    %398 = vmatpush1.msra.mxu0 0.0
    %399 = vmatprep.subr.mxu0 0.0
    %400 = vmatpush1.msra.mxu0 0.0
    %401 = vmatprep.subr.mxu0 0.0
    %402 = vmatpush1.msra.mxu0 0.0
    %403 = vmatprep.subr.mxu0 0.0
    %404 = vmatpush1.msra.mxu0 0.0
    %405 = vmatprep.subr.mxu0 0.0
    %406 = vmatpush1.msra.mxu0 0.0
    %407 = vmatprep.subr.mxu0 0.0
    %408 = vmatpush1.msra.mxu0 0.0
    %409 = vmatprep.subr.mxu0 0.0
    %410 = vmatpush1.msra.mxu0 0.0
    %411 = vmatprep.subr.mxu0 0.0
    %412 = vmatpush1.msra.mxu0 0.0
    %413 = vmatprep.subr.mxu0 0.0
    %414 = vmatpush1.msra.mxu0 0.0
    %415 = vmatprep.subr.mxu0 0.0
    %416 = vmatpush1.msra.mxu0 0.0
    %417 = vmatprep.subr.mxu0 0.0
    %418 = vmatpush1.msra.mxu0 0.0
    %419 = vmatprep.subr.mxu0 0.0
    %420 = vmatpush1.msra.mxu0 0.0
    %421 = vmatprep.subr.mxu0 0.0
    %422 = vmatpush1.msra.mxu0 0.0
    %423 = vmatprep.subr.mxu0 0.0
    %424 = vmatpush1.msra.mxu0 0.0
    %425 = vmatprep.subr.mxu0 0.0
    %426 = vmatpush1.msra.mxu0 0.0
    %427 = vmatprep.subr.mxu0 0.0
    %428 = vmatpush1.msra.mxu0 0.0
    %429 = vmatprep.subr.mxu0 0.0
    %430 = vmatpush1.msra.mxu0 0.0
    %431 = vmatprep.subr.mxu0 0.0
    %432 = vmatpush1.msra.mxu0 0.0
    %433 = vmatprep.subr.mxu0 0.0
    %434 = vmatpush1.msra.mxu0 0.0
    %435 = vmatprep.subr.mxu0 0.0
    %436 = vmatpush1.msra.mxu0 0.0
    %437 = vmatprep.mubr.f32.mxu0 0.0
    %438 = vmatmul.mubr.f32.gmra.mrb[0].mxu0 %v205
    %v439 = vpop.f32.mrb[0].mxu0
    %v440 = vadd.f32 %v192, %v439
    %v441 = vpop.f32.mrb[0].mxu0
    %v442 = vadd.f32 %v196, %v441
    %443 = vmatprep.mubr.f32.mxu0 0.0
    %444 = vmatmul.mubr.f32.gmra.mrb[0].mxu0 %v208
    %v445 = vpop.f32.mrb[0].mxu0
    %v446 = vadd.f32 %v192, %v445
    %v447 = vpop.f32.mrb[0].mxu0
    %v448 = vadd.f32 %v196, %v447
    %449 = vmatprep.mubr.f32.mxu0 0.0
    %450 = vmatmul.mubr.f32.gmra.mrb[0].mxu0 %v211
    %v451 = vpop.f32.mrb[0].mxu0
    %v452 = vpop.f32.mrb[0].mxu0
    %453 = vdwg.mxu0
    %v454 = vld [vmem:[%s1] sm:$0x3]
    %455 = vmatprep.subr.mxu0 0.0
    %456 = vmatpush1.xpose.msra.mxu0 %v359
    %457 = vmatprep.subr.mxu0 0.0
    %458 = vmatpush1.xpose.msra.mxu0 0.0
    %459 = vmatprep.subr.mxu0 0.0
    %460 = vmatpush1.xpose.msra.mxu0 0.0
    %461 = vmatprep.subr.mxu0 0.0
    %462 = vmatpush1.xpose.msra.mxu0 0.0
    %463 = vmatprep.subr.mxu0 0.0
    %464 = vmatpush1.xpose.msra.mxu0 0.0
    %465 = vmatprep.subr.mxu0 0.0
    %466 = vmatpush1.xpose.msra.mxu0 0.0
    %467 = vmatprep.subr.mxu0 0.0
    %468 = vmatpush1.xpose.msra.mxu0 0.0
    %469 = vmatprep.subr.mxu0 0.0
    %470 = vmatpush1.xpose.msra.mxu0 0.0
    %471 = vmatprep.subr.mxu0 0.0
    %472 = vmatpush1.xpose.msra.mxu0 0.0
    %473 = vmatprep.subr.mxu0 0.0
    %474 = vmatpush1.xpose.msra.mxu0 0.0
    %475 = vmatprep.subr.mxu0 0.0
    %476 = vmatpush1.xpose.msra.mxu0 0.0
    %477 = vmatprep.subr.mxu0 0.0
    %478 = vmatpush1.xpose.msra.mxu0 0.0
    %479 = vmatprep.subr.mxu0 0.0
    %480 = vmatpush1.xpose.msra.mxu0 0.0
    %481 = vmatprep.subr.mxu0 0.0
    %482 = vmatpush1.xpose.msra.mxu0 0.0
    %483 = vmatprep.subr.mxu0 0.0
    %484 = vmatpush1.xpose.msra.mxu0 0.0
    %485 = vmatprep.subr.mxu0 0.0
    %486 = vmatpush1.xpose.msra.mxu0 0.0
    %487 = vmatprep.subr.mxu0 0.0
    %488 = vmatpush1.xpose.msra.mxu0 0.0
    %489 = vmatprep.subr.mxu0 0.0
    %490 = vmatpush1.xpose.msra.mxu0 0.0
    %491 = vmatprep.subr.mxu0 0.0
    %492 = vmatpush1.xpose.msra.mxu0 0.0
    %493 = vmatprep.subr.mxu0 0.0
    %494 = vmatpush1.xpose.msra.mxu0 0.0
    %495 = vmatprep.subr.mxu0 0.0
    %496 = vmatpush1.xpose.msra.mxu0 0.0
    %497 = vmatprep.subr.mxu0 0.0
    %498 = vmatpush1.xpose.msra.mxu0 0.0
    %499 = vmatprep.subr.mxu0 0.0
    %500 = vmatpush1.xpose.msra.mxu0 0.0
    %501 = vmatprep.subr.mxu0 0.0
    %502 = vmatpush1.xpose.msra.mxu0 0.0
    %503 = vmatprep.subr.mxu0 0.0
    %504 = vmatpush1.xpose.msra.mxu0 0.0
    %505 = vmatprep.subr.mxu0 0.0
    %506 = vmatpush1.xpose.msra.mxu0 0.0
    %507 = vmatprep.subr.mxu0 0.0
    %508 = vmatpush1.xpose.msra.mxu0 0.0
    %509 = vmatprep.subr.mxu0 0.0
    %510 = vmatpush1.xpose.msra.mxu0 0.0
    %511 = vmatprep.subr.mxu0 0.0
    %512 = vmatpush1.xpose.msra.mxu0 0.0
    %513 = vmatprep.subr.mxu0 0.0
    %514 = vmatpush1.xpose.msra.mxu0 0.0
    %515 = vmatprep.subr.mxu0 0.0
    %516 = vmatpush1.xpose.msra.mxu0 0.0
    %517 = vmatprep.subr.mxu0 0.0
    %518 = vmatpush1.xpose.msra.mxu0 0.0
    %519 = vmatprep.mubr.f32.mxu0 0.0
    %520 = vmatmul.mubr.f32.gmra.mrb[0].mxu0 %v288
    %v521 = vpop.f32.mrb[0].mxu0
    %v522 = vadd.f32 %v454, %v521
    %v523 = vpop.f32.mrb[0].mxu0
    %524 = vdwg.mxu0
    %vm525 = vcmask 57344
    %v526 = vsel %vm525, %v522, -inf
    %527 = vmax.xlane.f32.xlu0 %v526
    %v528 = vpop.xlane.xlu0 %527
    %v529 = vsub.f32 %v522, %v528
    %v530 = vmul.f32 %v529, 1.442695
    %v531 = vpow.pop %v530
    %v532 = vsel %vm525, %v531, 0.0
    %533 = vadd.xlane.f32.xlu0 %v532
    %v534 = vpop.xlane.xlu0 %533
    %v535 = vrcp.pop %v534
    %v536 = vmul.f32 %v531, %v535
    %vm537 = vcmask 64512
    %v539 = vsel %vm537, %v536, 0
    %541 = vmatprep.subr.mxu0 0.0
    %542 = vmatpush1.msra.mxu0 %v440
    %543 = vmatprep.subr.mxu0 0.0
    %544 = vmatpush1.msra.mxu0 0.0
    %545 = vmatprep.subr.mxu0 0.0
    %546 = vmatpush1.msra.mxu0 0.0
    %547 = vmatprep.subr.mxu0 0.0
    %548 = vmatpush1.msra.mxu0 0.0
    %549 = vmatprep.subr.mxu0 0.0
    %550 = vmatpush1.msra.mxu0 0.0
    %551 = vmatprep.subr.mxu0 0.0
    %552 = vmatpush1.msra.mxu0 0.0
    %553 = vmatprep.subr.mxu0 0.0
    %554 = vmatpush1.msra.mxu0 0.0
    %555 = vmatprep.subr.mxu0 0.0
    %556 = vmatpush1.msra.mxu0 0.0
    %557 = vmatprep.subr.mxu0 0.0
    %558 = vmatpush1.msra.mxu0 0.0
    %559 = vmatprep.subr.mxu0 0.0
    %560 = vmatpush1.msra.mxu0 0.0
    %561 = vmatprep.subr.mxu0 0.0
    %562 = vmatpush1.msra.mxu0 0.0
    %563 = vmatprep.subr.mxu0 0.0
    %564 = vmatpush1.msra.mxu0 0.0
    %565 = vmatprep.subr.mxu0 0.0
    %566 = vmatpush1.msra.mxu0 0.0
    %567 = vmatprep.subr.mxu0 0.0
    %568 = vmatpush1.msra.mxu0 0.0
    %569 = vmatprep.subr.mxu0 0.0
    %570 = vmatpush1.msra.mxu0 0.0
    %571 = vmatprep.subr.mxu0 0.0
    %572 = vmatpush1.msra.mxu0 0.0
    %573 = vmatprep.subr.mxu0 0.0
    %574 = vmatpush1.msra.mxu0 0.0
    %575 = vmatprep.subr.mxu0 0.0
    %576 = vmatpush1.msra.mxu0 0.0
    %577 = vmatprep.subr.mxu0 0.0
    %578 = vmatpush1.msra.mxu0 0.0
    %579 = vmatprep.subr.mxu0 0.0
    %580 = vmatpush1.msra.mxu0 0.0
    %581 = vmatprep.subr.mxu0 0.0
    %582 = vmatpush1.msra.mxu0 0.0
    %583 = vmatprep.subr.mxu0 0.0
    %584 = vmatpush1.msra.mxu0 0.0
    %585 = vmatprep.subr.mxu0 0.0
    %586 = vmatpush1.msra.mxu0 0.0
    %587 = vmatprep.subr.mxu0 0.0
    %588 = vmatpush1.msra.mxu0 0.0
    %589 = vmatprep.subr.mxu0 0.0
    %590 = vmatpush1.msra.mxu0 0.0
    %591 = vmatprep.subr.mxu0 0.0
    %592 = vmatpush1.msra.mxu0 0.0
    %593 = vmatprep.subr.mxu0 0.0
    %594 = vmatpush1.msra.mxu0 0.0
    %595 = vmatprep.subr.mxu0 0.0
    %596 = vmatpush1.msra.mxu0 0.0
    %597 = vmatprep.subr.mxu0 0.0
    %598 = vmatpush1.msra.mxu0 0.0
    %599 = vmatprep.subr.mxu0 0.0
    %600 = vmatpush1.msra.mxu0 0.0
    %601 = vmatprep.subr.mxu0 0.0
    %602 = vmatpush1.msra.mxu0 0.0
    %603 = vmatprep.subr.mxu0 0.0
    %604 = vmatpush1.msra.mxu0 0.0
    %605 = vmatprep.mubr.f32.mxu0 0.0
    %606 = vmatmul.mubr.f32.gmra.mrb[0].mxu0 %v539
    %v607 = vpop.f32.mrb[0].mxu0
    %v608 = vadd.f32 0.0, %v607
    %v609 = vpop.f32.mrb[0].mxu0
    %610 = vdwg.mxu0
    %611 = vmatprep.subr.mxu0 0.0
    %612 = vmatpush1.xpose.msra.mxu0 %v361
    %613 = vmatprep.subr.mxu0 0.0
    %614 = vmatpush1.xpose.msra.mxu0 0.0
    %615 = vmatprep.subr.mxu0 0.0
    %616 = vmatpush1.xpose.msra.mxu0 0.0
    %617 = vmatprep.subr.mxu0 0.0
    %618 = vmatpush1.xpose.msra.mxu0 0.0
    %619 = vmatprep.subr.mxu0 0.0
    %620 = vmatpush1.xpose.msra.mxu0 0.0
    %621 = vmatprep.subr.mxu0 0.0
    %622 = vmatpush1.xpose.msra.mxu0 0.0
    %623 = vmatprep.subr.mxu0 0.0
    %624 = vmatpush1.xpose.msra.mxu0 0.0
    %625 = vmatprep.subr.mxu0 0.0
    %626 = vmatpush1.xpose.msra.mxu0 0.0
    %627 = vmatprep.subr.mxu0 0.0
    %628 = vmatpush1.xpose.msra.mxu0 0.0
    %629 = vmatprep.subr.mxu0 0.0
    %630 = vmatpush1.xpose.msra.mxu0 0.0
    %631 = vmatprep.subr.mxu0 0.0
    %632 = vmatpush1.xpose.msra.mxu0 0.0
    %633 = vmatprep.subr.mxu0 0.0
    %634 = vmatpush1.xpose.msra.mxu0 0.0
    %635 = vmatprep.subr.mxu0 0.0
    %636 = vmatpush1.xpose.msra.mxu0 0.0
    %637 = vmatprep.subr.mxu0 0.0
    %638 = vmatpush1.xpose.msra.mxu0 0.0
    %639 = vmatprep.subr.mxu0 0.0
    %640 = vmatpush1.xpose.msra.mxu0 0.0
    %641 = vmatprep.subr.mxu0 0.0
    %642 = vmatpush1.xpose.msra.mxu0 0.0
    %643 = vmatprep.subr.mxu0 0.0
    %644 = vmatpush1.xpose.msra.mxu0 0.0
    %645 = vmatprep.subr.mxu0 0.0
    %646 = vmatpush1.xpose.msra.mxu0 0.0
    %647 = vmatprep.subr.mxu0 0.0
    %648 = vmatpush1.xpose.msra.mxu0 0.0
    %649 = vmatprep.subr.mxu0 0.0
    %650 = vmatpush1.xpose.msra.mxu0 0.0
    %651 = vmatprep.subr.mxu0 0.0
    %652 = vmatpush1.xpose.msra.mxu0 0.0
    %653 = vmatprep.subr.mxu0 0.0
    %654 = vmatpush1.xpose.msra.mxu0 0.0
    %655 = vmatprep.subr.mxu0 0.0
    %656 = vmatpush1.xpose.msra.mxu0 0.0
    %657 = vmatprep.subr.mxu0 0.0
    %658 = vmatpush1.xpose.msra.mxu0 0.0
    %659 = vmatprep.subr.mxu0 0.0
    %660 = vmatpush1.xpose.msra.mxu0 0.0
    %661 = vmatprep.subr.mxu0 0.0
    %662 = vmatpush1.xpose.msra.mxu0 0.0
    %663 = vmatprep.subr.mxu0 0.0
    %664 = vmatpush1.xpose.msra.mxu0 0.0
    %665 = vmatprep.subr.mxu0 0.0
    %666 = vmatpush1.xpose.msra.mxu0 0.0
    %667 = vmatprep.subr.mxu0 0.0
    %668 = vmatpush1.xpose.msra.mxu0 0.0
    %669 = vmatprep.subr.mxu0 0.0
    %670 = vmatpush1.xpose.msra.mxu0 0.0
    %671 = vmatprep.subr.mxu0 0.0
    %672 = vmatpush1.xpose.msra.mxu0 0.0
    %673 = vmatprep.subr.mxu0 0.0
    %674 = vmatpush1.xpose.msra.mxu0 0.0
    %675 = vmatprep.mubr.f32.mxu0 0.0
    %676 = vmatmul.mubr.f32.gmra.mrb[0].mxu0 %v290
    %v677 = vpop.f32.mrb[0].mxu0
    %v678 = vadd.f32 %v454, %v677
    %v679 = vpop.f32.mrb[0].mxu0
    %680 = vdwg.mxu0
    %v681 = vsel %vm525, %v678, -inf
    %682 = vmax.xlane.f32.xlu0 %v681
    %v683 = vpop.xlane.xlu0 %682
    %v684 = vsub.f32 %v678, %v683
    %v685 = vmul.f32 %v684, 1.442695
    %v686 = vpow.pop %v685
    %v687 = vsel %vm525, %v686, 0.0
    %688 = vadd.xlane.f32.xlu0 %v687
    %v689 = vpop.xlane.xlu0 %688
    %v690 = vrcp.pop %v689
    %v691 = vmul.f32 %v686, %v690
    %v693 = vsel %vm537, %v691, 0
    %695 = vmatprep.subr.mxu0 0.0
    %696 = vmatpush1.msra.mxu0 %v442
    %697 = vmatprep.subr.mxu0 0.0
    %698 = vmatpush1.msra.mxu0 0.0
    %699 = vmatprep.subr.mxu0 0.0
    %700 = vmatpush1.msra.mxu0 0.0
    %701 = vmatprep.subr.mxu0 0.0
    %702 = vmatpush1.msra.mxu0 0.0
    %703 = vmatprep.subr.mxu0 0.0
    %704 = vmatpush1.msra.mxu0 0.0
    %705 = vmatprep.subr.mxu0 0.0
    %706 = vmatpush1.msra.mxu0 0.0
    %707 = vmatprep.subr.mxu0 0.0
    %708 = vmatpush1.msra.mxu0 0.0
    %709 = vmatprep.subr.mxu0 0.0
    %710 = vmatpush1.msra.mxu0 0.0
    %711 = vmatprep.subr.mxu0 0.0
    %712 = vmatpush1.msra.mxu0 0.0
    %713 = vmatprep.subr.mxu0 0.0
    %714 = vmatpush1.msra.mxu0 0.0
    %715 = vmatprep.subr.mxu0 0.0
    %716 = vmatpush1.msra.mxu0 0.0
    %717 = vmatprep.subr.mxu0 0.0
    %718 = vmatpush1.msra.mxu0 0.0
    %719 = vmatprep.subr.mxu0 0.0
    %720 = vmatpush1.msra.mxu0 0.0
    %721 = vmatprep.subr.mxu0 0.0
    %722 = vmatpush1.msra.mxu0 0.0
    %723 = vmatprep.subr.mxu0 0.0
    %724 = vmatpush1.msra.mxu0 0.0
    %725 = vmatprep.subr.mxu0 0.0
    %726 = vmatpush1.msra.mxu0 0.0
    %727 = vmatprep.subr.mxu0 0.0
    %728 = vmatpush1.msra.mxu0 0.0
    %729 = vmatprep.subr.mxu0 0.0
    %730 = vmatpush1.msra.mxu0 0.0
    %731 = vmatprep.subr.mxu0 0.0
    %732 = vmatpush1.msra.mxu0 0.0
    %733 = vmatprep.subr.mxu0 0.0
    %734 = vmatpush1.msra.mxu0 0.0
    %735 = vmatprep.subr.mxu0 0.0
    %736 = vmatpush1.msra.mxu0 0.0
    %737 = vmatprep.subr.mxu0 0.0
    %738 = vmatpush1.msra.mxu0 0.0
    %739 = vmatprep.subr.mxu0 0.0
    %740 = vmatpush1.msra.mxu0 0.0
    %741 = vmatprep.subr.mxu0 0.0
    %742 = vmatpush1.msra.mxu0 0.0
    %743 = vmatprep.subr.mxu0 0.0
    %744 = vmatpush1.msra.mxu0 0.0
    %745 = vmatprep.subr.mxu0 0.0
    %746 = vmatpush1.msra.mxu0 0.0
    %747 = vmatprep.subr.mxu0 0.0
    %748 = vmatpush1.msra.mxu0 0.0
    %749 = vmatprep.subr.mxu0 0.0
    %750 = vmatpush1.msra.mxu0 0.0
    %751 = vmatprep.subr.mxu0 0.0
    %752 = vmatpush1.msra.mxu0 0.0
    %753 = vmatprep.subr.mxu0 0.0
    %754 = vmatpush1.msra.mxu0 0.0
    %755 = vmatprep.subr.mxu0 0.0
    %756 = vmatpush1.msra.mxu0 0.0
    %757 = vmatprep.subr.mxu0 0.0
    %758 = vmatpush1.msra.mxu0 0.0
    %759 = vmatprep.mubr.f32.mxu0 0.0
    %760 = vmatmul.mubr.f32.gmra.mrb[0].mxu0 %v693
    %v761 = vpop.f32.mrb[0].mxu0
    %v762 = vadd.f32 0.0, %v761
    %v763 = vpop.f32.mrb[0].mxu0
    %764 = vdwg.mxu0
    %v766 = vrot.slane %v288, 1
    %v769 = vrot.slane %v454, 1
    %771 = vmatprep.subr.mxu0 0.0
    %772 = vmatpush1.xpose.msra.mxu0 %v365
    %773 = vmatprep.subr.mxu0 0.0
    %774 = vmatpush1.xpose.msra.mxu0 0.0
    %775 = vmatprep.subr.mxu0 0.0
    %776 = vmatpush1.xpose.msra.mxu0 0.0
    %777 = vmatprep.subr.mxu0 0.0
    %778 = vmatpush1.xpose.msra.mxu0 0.0
    %779 = vmatprep.subr.mxu0 0.0
    %780 = vmatpush1.xpose.msra.mxu0 0.0
    %781 = vmatprep.subr.mxu0 0.0
    %782 = vmatpush1.xpose.msra.mxu0 0.0
    %783 = vmatprep.subr.mxu0 0.0
    %784 = vmatpush1.xpose.msra.mxu0 0.0
    %785 = vmatprep.subr.mxu0 0.0
    %786 = vmatpush1.xpose.msra.mxu0 0.0
    %787 = vmatprep.subr.mxu0 0.0
    %788 = vmatpush1.xpose.msra.mxu0 0.0
    %789 = vmatprep.subr.mxu0 0.0
    %790 = vmatpush1.xpose.msra.mxu0 0.0
    %791 = vmatprep.subr.mxu0 0.0
    %792 = vmatpush1.xpose.msra.mxu0 0.0
    %793 = vmatprep.subr.mxu0 0.0
    %794 = vmatpush1.xpose.msra.mxu0 0.0
    %795 = vmatprep.subr.mxu0 0.0
    %796 = vmatpush1.xpose.msra.mxu0 0.0
    %797 = vmatprep.subr.mxu0 0.0
    %798 = vmatpush1.xpose.msra.mxu0 0.0
    %799 = vmatprep.subr.mxu0 0.0
    %800 = vmatpush1.xpose.msra.mxu0 0.0
    %801 = vmatprep.subr.mxu0 0.0
    %802 = vmatpush1.xpose.msra.mxu0 0.0
    %803 = vmatprep.subr.mxu0 0.0
    %804 = vmatpush1.xpose.msra.mxu0 0.0
    %805 = vmatprep.subr.mxu0 0.0
    %806 = vmatpush1.xpose.msra.mxu0 0.0
    %807 = vmatprep.subr.mxu0 0.0
    %808 = vmatpush1.xpose.msra.mxu0 0.0
    %809 = vmatprep.subr.mxu0 0.0
    %810 = vmatpush1.xpose.msra.mxu0 0.0
    %811 = vmatprep.subr.mxu0 0.0
    %812 = vmatpush1.xpose.msra.mxu0 0.0
    %813 = vmatprep.subr.mxu0 0.0
    %814 = vmatpush1.xpose.msra.mxu0 0.0
    %815 = vmatprep.subr.mxu0 0.0
    %816 = vmatpush1.xpose.msra.mxu0 0.0
    %817 = vmatprep.subr.mxu0 0.0
    %818 = vmatpush1.xpose.msra.mxu0 0.0
    %819 = vmatprep.subr.mxu0 0.0
    %820 = vmatpush1.xpose.msra.mxu0 0.0
    %821 = vmatprep.subr.mxu0 0.0
    %822 = vmatpush1.xpose.msra.mxu0 0.0
    %823 = vmatprep.subr.mxu0 0.0
    %824 = vmatpush1.xpose.msra.mxu0 0.0
    %825 = vmatprep.subr.mxu0 0.0
    %826 = vmatpush1.xpose.msra.mxu0 0.0
    %827 = vmatprep.subr.mxu0 0.0
    %828 = vmatpush1.xpose.msra.mxu0 0.0
    %829 = vmatprep.subr.mxu0 0.0
    %830 = vmatpush1.xpose.msra.mxu0 0.0
    %831 = vmatprep.subr.mxu0 0.0
    %832 = vmatpush1.xpose.msra.mxu0 0.0
    %833 = vmatprep.subr.mxu0 0.0
    %834 = vmatpush1.xpose.msra.mxu0 0.0
    %835 = vmatprep.mubr.f32.mxu0 0.0
    %836 = vmatmul.mubr.f32.gmra.mrb[0].mxu0 %v766
    %v837 = vpop.f32.mrb[0].mxu0
    %v838 = vadd.f32 %v769, %v837
    %v839 = vpop.f32.mrb[0].mxu0
    %840 = vdwg.mxu0
    %v841 = vsel %vm525, %v838, -inf
    %842 = vmax.xlane.f32.xlu0 %v841
    %v843 = vpop.xlane.xlu0 %842
    %v844 = vsub.f32 %v838, %v843
    %v845 = vmul.f32 %v844, 1.442695
    %v846 = vpow.pop %v845
    %v847 = vsel %vm525, %v846, 0.0
    %848 = vadd.xlane.f32.xlu0 %v847
    %v849 = vpop.xlane.xlu0 %848
    %v850 = vrcp.pop %v849
    %v851 = vmul.f32 %v846, %v850
    %v853 = vsel %vm537, %v851, 0
    %855 = vmatprep.subr.mxu0 0.0
    %856 = vmatpush1.msra.mxu0 %v446
    %857 = vmatprep.subr.mxu0 0.0
    %858 = vmatpush1.msra.mxu0 0.0
    %859 = vmatprep.subr.mxu0 0.0
    %860 = vmatpush1.msra.mxu0 0.0
    %861 = vmatprep.subr.mxu0 0.0
    %862 = vmatpush1.msra.mxu0 0.0
    %863 = vmatprep.subr.mxu0 0.0
    %864 = vmatpush1.msra.mxu0 0.0
    %865 = vmatprep.subr.mxu0 0.0
    %866 = vmatpush1.msra.mxu0 0.0
    %867 = vmatprep.subr.mxu0 0.0
    %868 = vmatpush1.msra.mxu0 0.0
    %869 = vmatprep.subr.mxu0 0.0
    %870 = vmatpush1.msra.mxu0 0.0
    %871 = vmatprep.subr.mxu0 0.0
    %872 = vmatpush1.msra.mxu0 0.0
    %873 = vmatprep.subr.mxu0 0.0
    %874 = vmatpush1.msra.mxu0 0.0
    %875 = vmatprep.subr.mxu0 0.0
    %876 = vmatpush1.msra.mxu0 0.0
    %877 = vmatprep.subr.mxu0 0.0
    %878 = vmatpush1.msra.mxu0 0.0
    %879 = vmatprep.subr.mxu0 0.0
    %880 = vmatpush1.msra.mxu0 0.0
    %881 = vmatprep.subr.mxu0 0.0
    %882 = vmatpush1.msra.mxu0 0.0
    %883 = vmatprep.subr.mxu0 0.0
    %884 = vmatpush1.msra.mxu0 0.0
    %885 = vmatprep.subr.mxu0 0.0
    %886 = vmatpush1.msra.mxu0 0.0
    %887 = vmatprep.subr.mxu0 0.0
    %888 = vmatpush1.msra.mxu0 0.0
    %889 = vmatprep.subr.mxu0 0.0
    %890 = vmatpush1.msra.mxu0 0.0
    %891 = vmatprep.subr.mxu0 0.0
    %892 = vmatpush1.msra.mxu0 0.0
    %893 = vmatprep.subr.mxu0 0.0
    %894 = vmatpush1.msra.mxu0 0.0
    %895 = vmatprep.subr.mxu0 0.0
    %896 = vmatpush1.msra.mxu0 0.0
    %897 = vmatprep.subr.mxu0 0.0
    %898 = vmatpush1.msra.mxu0 0.0
    %899 = vmatprep.subr.mxu0 0.0
    %900 = vmatpush1.msra.mxu0 0.0
    %901 = vmatprep.subr.mxu0 0.0
    %902 = vmatpush1.msra.mxu0 0.0
    %903 = vmatprep.subr.mxu0 0.0
    %904 = vmatpush1.msra.mxu0 0.0
    %905 = vmatprep.subr.mxu0 0.0
    %906 = vmatpush1.msra.mxu0 0.0
    %907 = vmatprep.subr.mxu0 0.0
    %908 = vmatpush1.msra.mxu0 0.0
    %909 = vmatprep.subr.mxu0 0.0
    %910 = vmatpush1.msra.mxu0 0.0
    %911 = vmatprep.subr.mxu0 0.0
    %912 = vmatpush1.msra.mxu0 0.0
    %913 = vmatprep.subr.mxu0 0.0
    %914 = vmatpush1.msra.mxu0 0.0
    %915 = vmatprep.subr.mxu0 0.0
    %916 = vmatpush1.msra.mxu0 0.0
    %917 = vmatprep.subr.mxu0 0.0
    %918 = vmatpush1.msra.mxu0 0.0
    %919 = vmatprep.mubr.f32.mxu0 0.0
    %920 = vmatmul.mubr.f32.gmra.mrb[0].mxu0 %v853
    %v921 = vpop.f32.mrb[0].mxu0
    %v922 = vadd.f32 0.0, %v921
    %v923 = vpop.f32.mrb[0].mxu0
    %924 = vdwg.mxu0
    %v926 = vrot.slane %v290, 1
    %928 = vmatprep.subr.mxu0 0.0
    %929 = vmatpush1.xpose.msra.mxu0 %v367
    %930 = vmatprep.subr.mxu0 0.0
    %931 = vmatpush1.xpose.msra.mxu0 0.0
    %932 = vmatprep.subr.mxu0 0.0
    %933 = vmatpush1.xpose.msra.mxu0 0.0
    %934 = vmatprep.subr.mxu0 0.0
    %935 = vmatpush1.xpose.msra.mxu0 0.0
    %936 = vmatprep.subr.mxu0 0.0
    %937 = vmatpush1.xpose.msra.mxu0 0.0
    %938 = vmatprep.subr.mxu0 0.0
    %939 = vmatpush1.xpose.msra.mxu0 0.0
    %940 = vmatprep.subr.mxu0 0.0
    %941 = vmatpush1.xpose.msra.mxu0 0.0
    %942 = vmatprep.subr.mxu0 0.0
    %943 = vmatpush1.xpose.msra.mxu0 0.0
    %944 = vmatprep.subr.mxu0 0.0
    %945 = vmatpush1.xpose.msra.mxu0 0.0
    %946 = vmatprep.subr.mxu0 0.0
    %947 = vmatpush1.xpose.msra.mxu0 0.0
    %948 = vmatprep.subr.mxu0 0.0
    %949 = vmatpush1.xpose.msra.mxu0 0.0
    %950 = vmatprep.subr.mxu0 0.0
    %951 = vmatpush1.xpose.msra.mxu0 0.0
    %952 = vmatprep.subr.mxu0 0.0
    %953 = vmatpush1.xpose.msra.mxu0 0.0
    %954 = vmatprep.subr.mxu0 0.0
    %955 = vmatpush1.xpose.msra.mxu0 0.0
    %956 = vmatprep.subr.mxu0 0.0
    %957 = vmatpush1.xpose.msra.mxu0 0.0
    %958 = vmatprep.subr.mxu0 0.0
    %959 = vmatpush1.xpose.msra.mxu0 0.0
    %960 = vmatprep.subr.mxu0 0.0
    %961 = vmatpush1.xpose.msra.mxu0 0.0
    %962 = vmatprep.subr.mxu0 0.0
    %963 = vmatpush1.xpose.msra.mxu0 0.0
    %964 = vmatprep.subr.mxu0 0.0
    %965 = vmatpush1.xpose.msra.mxu0 0.0
    %966 = vmatprep.subr.mxu0 0.0
    %967 = vmatpush1.xpose.msra.mxu0 0.0
    %968 = vmatprep.subr.mxu0 0.0
    %969 = vmatpush1.xpose.msra.mxu0 0.0
    %970 = vmatprep.subr.mxu0 0.0
    %971 = vmatpush1.xpose.msra.mxu0 0.0
    %972 = vmatprep.subr.mxu0 0.0
    %973 = vmatpush1.xpose.msra.mxu0 0.0
    %974 = vmatprep.subr.mxu0 0.0
    %975 = vmatpush1.xpose.msra.mxu0 0.0
    %976 = vmatprep.subr.mxu0 0.0
    %977 = vmatpush1.xpose.msra.mxu0 0.0
    %978 = vmatprep.subr.mxu0 0.0
    %979 = vmatpush1.xpose.msra.mxu0 0.0
    %980 = vmatprep.subr.mxu0 0.0
    %981 = vmatpush1.xpose.msra.mxu0 0.0
    %982 = vmatprep.subr.mxu0 0.0
    %983 = vmatpush1.xpose.msra.mxu0 0.0
    %984 = vmatprep.subr.mxu0 0.0
    %985 = vmatpush1.xpose.msra.mxu0 0.0
    %986 = vmatprep.subr.mxu0 0.0
    %987 = vmatpush1.xpose.msra.mxu0 0.0
    %988 = vmatprep.subr.mxu0 0.0
    %989 = vmatpush1.xpose.msra.mxu0 0.0
    %990 = vmatprep.subr.mxu0 0.0
    %991 = vmatpush1.xpose.msra.mxu0 0.0
    %992 = vmatprep.mubr.f32.mxu0 0.0
    %993 = vmatmul.mubr.f32.gmra.mrb[0].mxu0 %v926
    %v994 = vpop.f32.mrb[0].mxu0
    %v995 = vadd.f32 %v769, %v994
    %v996 = vpop.f32.mrb[0].mxu0
    %997 = vdwg.mxu0
    %v998 = vsel %vm525, %v995, -inf
    %999 = vmax.xlane.f32.xlu0 %v998
    %v1000 = vpop.xlane.xlu0 %999
    %v1001 = vsub.f32 %v995, %v1000
    %v1002 = vmul.f32 %v1001, 1.442695
    %v1003 = vpow.pop %v1002
    %v1004 = vsel %vm525, %v1003, 0.0
    %1005 = vadd.xlane.f32.xlu0 %v1004
    %v1006 = vpop.xlane.xlu0 %1005
    %v1007 = vrcp.pop %v1006
    %v1008 = vmul.f32 %v1003, %v1007
    %v1010 = vsel %vm537, %v1008, 0
    %1012 = vmatprep.subr.mxu0 0.0
    %1013 = vmatpush1.msra.mxu0 %v448
    %1014 = vmatprep.subr.mxu0 0.0
    %1015 = vmatpush1.msra.mxu0 0.0
    %1016 = vmatprep.subr.mxu0 0.0
    %1017 = vmatpush1.msra.mxu0 0.0
    %1018 = vmatprep.subr.mxu0 0.0
    %1019 = vmatpush1.msra.mxu0 0.0
    %1020 = vmatprep.subr.mxu0 0.0
    %1021 = vmatpush1.msra.mxu0 0.0
    %1022 = vmatprep.subr.mxu0 0.0
    %1023 = vmatpush1.msra.mxu0 0.0
    %1024 = vmatprep.subr.mxu0 0.0
    %1025 = vmatpush1.msra.mxu0 0.0
    %1026 = vmatprep.subr.mxu0 0.0
    %1027 = vmatpush1.msra.mxu0 0.0
    %1028 = vmatprep.subr.mxu0 0.0
    %1029 = vmatpush1.msra.mxu0 0.0
    %1030 = vmatprep.subr.mxu0 0.0
    %1031 = vmatpush1.msra.mxu0 0.0
    %1032 = vmatprep.subr.mxu0 0.0
    %1033 = vmatpush1.msra.mxu0 0.0
    %1034 = vmatprep.subr.mxu0 0.0
    %1035 = vmatpush1.msra.mxu0 0.0
    %1036 = vmatprep.subr.mxu0 0.0
    %1037 = vmatpush1.msra.mxu0 0.0
    %1038 = vmatprep.subr.mxu0 0.0
    %1039 = vmatpush1.msra.mxu0 0.0
    %1040 = vmatprep.subr.mxu0 0.0
    %1041 = vmatpush1.msra.mxu0 0.0
    %1042 = vmatprep.subr.mxu0 0.0
    %1043 = vmatpush1.msra.mxu0 0.0
    %1044 = vmatprep.subr.mxu0 0.0
    %1045 = vmatpush1.msra.mxu0 0.0
    %1046 = vmatprep.subr.mxu0 0.0
    %1047 = vmatpush1.msra.mxu0 0.0
    %1048 = vmatprep.subr.mxu0 0.0
    %1049 = vmatpush1.msra.mxu0 0.0
    %1050 = vmatprep.subr.mxu0 0.0
    %1051 = vmatpush1.msra.mxu0 0.0
    %1052 = vmatprep.subr.mxu0 0.0
    %1053 = vmatpush1.msra.mxu0 0.0
    %1054 = vmatprep.subr.mxu0 0.0
    %1055 = vmatpush1.msra.mxu0 0.0
    %1056 = vmatprep.subr.mxu0 0.0
    %1057 = vmatpush1.msra.mxu0 0.0
    %1058 = vmatprep.subr.mxu0 0.0
    %1059 = vmatpush1.msra.mxu0 0.0
    %1060 = vmatprep.subr.mxu0 0.0
    %1061 = vmatpush1.msra.mxu0 0.0
    %1062 = vmatprep.subr.mxu0 0.0
    %1063 = vmatpush1.msra.mxu0 0.0
    %1064 = vmatprep.subr.mxu0 0.0
    %1065 = vmatpush1.msra.mxu0 0.0
    %1066 = vmatprep.subr.mxu0 0.0
    %1067 = vmatpush1.msra.mxu0 0.0
    %1068 = vmatprep.subr.mxu0 0.0
    %1069 = vmatpush1.msra.mxu0 0.0
    %1070 = vmatprep.subr.mxu0 0.0
    %1071 = vmatpush1.msra.mxu0 0.0
    %1072 = vmatprep.subr.mxu0 0.0
    %1073 = vmatpush1.msra.mxu0 0.0
    %1074 = vmatprep.subr.mxu0 0.0
    %1075 = vmatpush1.msra.mxu0 0.0
    %1076 = vmatprep.mubr.f32.mxu0 0.0
    %1077 = vmatmul.mubr.f32.gmra.mrb[0].mxu0 %v1010
    %v1078 = vpop.f32.mrb[0].mxu0
    %v1079 = vadd.f32 0.0, %v1078
    %v1080 = vpop.f32.mrb[0].mxu0
    %1081 = vdwg.mxu0
    %v1084 = vrot.slane %v922, 7
    %v1085 = vrot.slane %v1079, 7
    %vm1088 = vcmask 1040384
    %v1089 = vsel %vm1088, %v608, %v1084
    %v1090 = vsel %vm1088, %v762, %v1085
    %v1091 = vld [vmem:[%s4 + $0x180] sm:$0xff]
    %v1092 = vld [vmem:[%s4] sm:$0xff]
    %v1093 = vld [vmem:[%s4 + $0x8] sm:$0xff]
    %v1094 = vld [vmem:[%s4 + $0x10] sm:$0xff]
    %v1095 = vld [vmem:[%s4 + $0x18] sm:$0xff]
    %v1096 = vld [vmem:[%s4 + $0x20] sm:$0xff]
    %v1097 = vld [vmem:[%s4 + $0x28] sm:$0xff]
    %v1098 = vld [vmem:[%s4 + $0x30] sm:$0xff]
    %v1099 = vld [vmem:[%s4 + $0x38] sm:$0xff]
    %v1100 = vld [vmem:[%s4 + $0x40] sm:$0xff]
    %v1101 = vld [vmem:[%s4 + $0x48] sm:$0xff]
    %v1102 = vld [vmem:[%s4 + $0x50] sm:$0xff]
    %v1103 = vld [vmem:[%s4 + $0x58] sm:$0xff]
    %v1104 = vld [vmem:[%s4 + $0x60] sm:$0xff]
    %v1105 = vld [vmem:[%s4 + $0x68] sm:$0xff]
    %v1106 = vld [vmem:[%s4 + $0x70] sm:$0xff]
    %v1107 = vld [vmem:[%s4 + $0x78] sm:$0xff]
    %v1108 = vld [vmem:[%s4 + $0x80] sm:$0xff]
    %v1109 = vld [vmem:[%s4 + $0x88] sm:$0xff]
    %v1110 = vld [vmem:[%s4 + $0x90] sm:$0xff]
    %v1111 = vld [vmem:[%s4 + $0x98] sm:$0xff]
    %v1112 = vld [vmem:[%s4 + $0xa0] sm:$0xff]
    %v1113 = vld [vmem:[%s4 + $0xa8] sm:$0xff]
    %v1114 = vld [vmem:[%s4 + $0xb0] sm:$0xff]
    %v1115 = vld [vmem:[%s4 + $0xb8] sm:$0xff]
    %v1116 = vld [vmem:[%s4 + $0xc0] sm:$0xff]
    %v1117 = vld [vmem:[%s4 + $0xc8] sm:$0xff]
    %v1118 = vld [vmem:[%s4 + $0xd0] sm:$0xff]
    %v1119 = vld [vmem:[%s4 + $0xd8] sm:$0xff]
    %v1120 = vld [vmem:[%s4 + $0xe0] sm:$0xff]
    %v1121 = vld [vmem:[%s4 + $0xe8] sm:$0xff]
    %v1122 = vld [vmem:[%s4 + $0xf0] sm:$0xff]
    %v1123 = vld [vmem:[%s4 + $0xf8] sm:$0xff]
    %v1124 = vlaneseq
    %v1125 = vshrl.u32 %v1124, 7
    %v1126 = vsub.s32 0, %v1125
    %v1127 = vrot.slane %v1091, %v1126
    %1128 = vmatprep.subr.mxu0 0.0
    %1129 = vmatpush1.msra.mxu0 %v1092
    %1130 = vmatprep.subr.mxu0 0.0
    %1131 = vmatpush1.msra.mxu0 %v1093
    %1132 = vmatprep.subr.mxu0 0.0
    %1133 = vmatpush1.msra.mxu0 %v1094
    %1134 = vmatprep.subr.mxu0 0.0
    %1135 = vmatpush1.msra.mxu0 %v1095
    %1136 = vmatprep.subr.mxu0 0.0
    %1137 = vmatpush1.msra.mxu0 %v1096
    %1138 = vmatprep.subr.mxu0 0.0
    %1139 = vmatpush1.msra.mxu0 %v1097
    %1140 = vmatprep.subr.mxu0 0.0
    %1141 = vmatpush1.msra.mxu0 %v1098
    %1142 = vmatprep.subr.mxu0 0.0
    %1143 = vmatpush1.msra.mxu0 %v1099
    %1144 = vmatprep.subr.mxu0 0.0
    %1145 = vmatpush1.msra.mxu0 %v1100
    %1146 = vmatprep.subr.mxu0 0.0
    %1147 = vmatpush1.msra.mxu0 %v1101
    %1148 = vmatprep.subr.mxu0 0.0
    %1149 = vmatpush1.msra.mxu0 %v1102
    %1150 = vmatprep.subr.mxu0 0.0
    %1151 = vmatpush1.msra.mxu0 %v1103
    %1152 = vmatprep.subr.mxu0 0.0
    %1153 = vmatpush1.msra.mxu0 %v1104
    %1154 = vmatprep.subr.mxu0 0.0
    %1155 = vmatpush1.msra.mxu0 %v1105
    %1156 = vmatprep.subr.mxu0 0.0
    %1157 = vmatpush1.msra.mxu0 %v1106
    %1158 = vmatprep.subr.mxu0 0.0
    %1159 = vmatpush1.msra.mxu0 %v1107
    %1160 = vmatprep.subr.mxu0 0.0
    %1161 = vmatpush1.msra.mxu0 %v1108
    %1162 = vmatprep.subr.mxu0 0.0
    %1163 = vmatpush1.msra.mxu0 %v1109
    %1164 = vmatprep.subr.mxu0 0.0
    %1165 = vmatpush1.msra.mxu0 %v1110
    %1166 = vmatprep.subr.mxu0 0.0
    %1167 = vmatpush1.msra.mxu0 %v1111
    %1168 = vmatprep.subr.mxu0 0.0
    %1169 = vmatpush1.msra.mxu0 %v1112
    %1170 = vmatprep.subr.mxu0 0.0
    %1171 = vmatpush1.msra.mxu0 %v1113
    %1172 = vmatprep.subr.mxu0 0.0
    %1173 = vmatpush1.msra.mxu0 %v1114
    %1174 = vmatprep.subr.mxu0 0.0
    %1175 = vmatpush1.msra.mxu0 %v1115
    %1176 = vmatprep.subr.mxu0 0.0
    %1177 = vmatpush1.msra.mxu0 %v1116
    %1178 = vmatprep.subr.mxu0 0.0
    %1179 = vmatpush1.msra.mxu0 %v1117
    %1180 = vmatprep.subr.mxu0 0.0
    %1181 = vmatpush1.msra.mxu0 %v1118
    %1182 = vmatprep.subr.mxu0 0.0
    %1183 = vmatpush1.msra.mxu0 %v1119
    %1184 = vmatprep.subr.mxu0 0.0
    %1185 = vmatpush1.msra.mxu0 %v1120
    %1186 = vmatprep.subr.mxu0 0.0
    %1187 = vmatpush1.msra.mxu0 %v1121
    %1188 = vmatprep.subr.mxu0 0.0
    %1189 = vmatpush1.msra.mxu0 %v1122
    %1190 = vmatprep.subr.mxu0 0.0
    %1191 = vmatpush1.msra.mxu0 %v1123
    %1192 = vmatprep.mubr.f32.mxu0 %v1090
    %1193 = vmatmul.mubr.f32.gmra.mrb[0].mxu0 %v1089
    %v1194 = vpop.f32.mrb[0].mxu0
    %v1195 = vadd.f32 %v1127, %v1194
    %v1196 = vpop.f32.mrb[0].mxu0
    %1197 = vdwg.mxu0
    %v1198 = vadd.f32 %v141, %v1195
    %vm1199 = vcmask 254976
    %v1200 = vsel %vm1199, %v1198, 0.0
    %1201 = vadd.xlane.f32.xlu0 %v1200
    %v1202 = vpop.xlane.xlu0 %1201
    %v1203 = vrcp.pop 32.0
    %v1204 = vmul.f32 %v1202, %v1203
    %v1205 = vsub.f32 %v1198, %v1204
    %v1206 = vmul.f32 %v1205, %v1205
    %v1207 = vsel %vm1199, %v1206, 0.0
    %1208 = vadd.xlane.f32.xlu0 %v1207
    %v1209 = vpop.xlane.xlu0 %1208
    %v1210 = vmul.f32 %v1209, %v1203
    %v1211 = vadd.f32 %v1210, 1e-05
    %v1212 = vrsqrt.pop %v1211
    %v1213 = vmul.f32 %v1205, %v1212
    %v1214 = vlaneseq
    %v1215 = vshrl.u32 %v1214, 7
    %v1216 = vsub.s32 2, %v1215
    %v1217 = vrot.slane %v1091, %v1216
    %v1218 = vmul.f32 %v1213, %v1217
    %v1219 = vlaneseq
    %v1220 = vshrl.u32 %v1219, 7
    %v1221 = vsub.s32 3, %v1220
    %v1222 = vrot.slane %v1091, %v1221
    %v1223 = vadd.f32 %v1218, %v1222
    %v1224 = vld [vmem:[%s3 + $0x30] sm:$0xff]
    %v1225 = vld [vmem:[%s3 + $0x70] sm:$0xff]
    %v1226 = vld [vmem:[%s3 + $0xb0] sm:$0xff]
    %v1227 = vld [vmem:[%s3 + $0xf0] sm:$0xff]
    %v1228 = vld [vmem:[%s3 + $0x130] ss:$0 sm:$0xff]
    %v1230 = vsel %vm203, %v1223, 0
    %1232 = vmatprep.subr.mxu0 0.0
    %1233 = vmatpush1.msra.mxu0 %v1224
    %1234 = vmatprep.subr.mxu0 0.0
    %1235 = vmatpush1.msra.mxu0 %v1225
    %1236 = vmatprep.subr.mxu0 0.0
    %1237 = vmatpush1.msra.mxu0 %v1226
    %1238 = vmatprep.subr.mxu0 0.0
    %1239 = vmatpush1.msra.mxu0 %v1227
    %1240 = vmatprep.subr.mxu0 0.0
    %1241 = vmatpush1.msra.mxu0 0.0
    %1242 = vmatprep.subr.mxu0 0.0
    %1243 = vmatpush1.msra.mxu0 0.0
    %1244 = vmatprep.subr.mxu0 0.0
    %1245 = vmatpush1.msra.mxu0 0.0
    %1246 = vmatprep.subr.mxu0 0.0
    %1247 = vmatpush1.msra.mxu0 0.0
    %1248 = vmatprep.subr.mxu0 0.0
    %1249 = vmatpush1.msra.mxu0 0.0
    %1250 = vmatprep.subr.mxu0 0.0
    %1251 = vmatpush1.msra.mxu0 0.0
    %1252 = vmatprep.subr.mxu0 0.0
    %1253 = vmatpush1.msra.mxu0 0.0
    %1254 = vmatprep.subr.mxu0 0.0
    %1255 = vmatpush1.msra.mxu0 0.0
    %1256 = vmatprep.subr.mxu0 0.0
    %1257 = vmatpush1.msra.mxu0 0.0
    %1258 = vmatprep.subr.mxu0 0.0
    %1259 = vmatpush1.msra.mxu0 0.0
    %1260 = vmatprep.subr.mxu0 0.0
    %1261 = vmatpush1.msra.mxu0 0.0
    %1262 = vmatprep.subr.mxu0 0.0
    %1263 = vmatpush1.msra.mxu0 0.0
    %1264 = vmatprep.subr.mxu0 0.0
    %1265 = vmatpush1.msra.mxu0 0.0
    %1266 = vmatprep.subr.mxu0 0.0
    %1267 = vmatpush1.msra.mxu0 0.0
    %1268 = vmatprep.subr.mxu0 0.0
    %1269 = vmatpush1.msra.mxu0 0.0
    %1270 = vmatprep.subr.mxu0 0.0
    %1271 = vmatpush1.msra.mxu0 0.0
    %1272 = vmatprep.subr.mxu0 0.0
    %1273 = vmatpush1.msra.mxu0 0.0
    %1274 = vmatprep.subr.mxu0 0.0
    %1275 = vmatpush1.msra.mxu0 0.0
    %1276 = vmatprep.subr.mxu0 0.0
    %1277 = vmatpush1.msra.mxu0 0.0
    %1278 = vmatprep.subr.mxu0 0.0
    %1279 = vmatpush1.msra.mxu0 0.0
    %1280 = vmatprep.subr.mxu0 0.0
    %1281 = vmatpush1.msra.mxu0 0.0
    %1282 = vmatprep.subr.mxu0 0.0
    %1283 = vmatpush1.msra.mxu0 0.0
    %1284 = vmatprep.subr.mxu0 0.0
    %1285 = vmatpush1.msra.mxu0 0.0
    %1286 = vmatprep.subr.mxu0 0.0
    %1287 = vmatpush1.msra.mxu0 0.0
    %1288 = vmatprep.subr.mxu0 0.0
    %1289 = vmatpush1.msra.mxu0 0.0
    %1290 = vmatprep.subr.mxu0 0.0
    %1291 = vmatpush1.msra.mxu0 0.0
    %1292 = vmatprep.subr.mxu0 0.0
    %1293 = vmatpush1.msra.mxu0 0.0
    %1294 = vmatprep.subr.mxu0 0.0
    %1295 = vmatpush1.msra.mxu0 0.0
    %1296 = vmatprep.mubr.f32.mxu0 0.0
    %1297 = vmatmul.mubr.f32.gmra.mrb[0].mxu0 %v1230
    %v1298 = vpop.f32.mrb[0].mxu0
    %v1299 = vadd.f32 %v1228, %v1298
    %v1300 = vpop.f32.mrb[0].mxu0
    %1301 = vdwg.mxu0
    %v1302 = vmul.f32 %v1299, %v1299
    %v1303 = vmul.f32 %v1299, %v1302
    %v1304 = vmul.f32 %v1303, 0.044715
    %v1305 = vadd.f32 %v1299, %v1304
    %v1306 = vmul.f32 %v1305, 0.7978846
    %v1307 = vtanh.pop %v1306
    %v1308 = vadd.f32 %v1307, 1.0
    %v1309 = vmul.f32 %v1308, 0.5
    %v1310 = vmul.f32 %v1299, %v1309
    %v1311 = vld [vmem:[%s4 + $0x100] sm:$0xff]
    %v1312 = vld [vmem:[%s4 + $0x108] sm:$0xff]
    %v1313 = vld [vmem:[%s4 + $0x110] sm:$0xff]
    %v1314 = vld [vmem:[%s4 + $0x118] sm:$0xff]
    %v1315 = vld [vmem:[%s4 + $0x120] sm:$0xff]
    %v1316 = vld [vmem:[%s4 + $0x128] sm:$0xff]
    %v1317 = vld [vmem:[%s4 + $0x130] sm:$0xff]
    %v1318 = vld [vmem:[%s4 + $0x138] sm:$0xff]
    %v1319 = vld [vmem:[%s4 + $0x140] sm:$0xff]
    %v1320 = vld [vmem:[%s4 + $0x148] sm:$0xff]
    %v1321 = vld [vmem:[%s4 + $0x150] sm:$0xff]
    %v1322 = vld [vmem:[%s4 + $0x158] sm:$0xff]
    %v1323 = vld [vmem:[%s4 + $0x160] sm:$0xff]
    %v1324 = vld [vmem:[%s4 + $0x168] sm:$0xff]
    %v1325 = vld [vmem:[%s4 + $0x170] sm:$0xff]
    %v1326 = vld [vmem:[%s4 + $0x178] sm:$0xff]
    %v1327 = vlaneseq
    %v1328 = vshrl.u32 %v1327, 7
    %v1329 = vsub.s32 1, %v1328
    %v1330 = vrot.slane %v1091, %v1329
    %1331 = vmatprep.subr.mxu0 0.0
    %1332 = vmatpush1.msra.mxu0 %v1311
    %1333 = vmatprep.subr.mxu0 0.0
    %1334 = vmatpush1.msra.mxu0 %v1312
    %1335 = vmatprep.subr.mxu0 0.0
    %1336 = vmatpush1.msra.mxu0 %v1313
    %1337 = vmatprep.subr.mxu0 0.0
    %1338 = vmatpush1.msra.mxu0 %v1314
    %1339 = vmatprep.subr.mxu0 0.0
    %1340 = vmatpush1.msra.mxu0 %v1315
    %1341 = vmatprep.subr.mxu0 0.0
    %1342 = vmatpush1.msra.mxu0 %v1316
    %1343 = vmatprep.subr.mxu0 0.0
    %1344 = vmatpush1.msra.mxu0 %v1317
    %1345 = vmatprep.subr.mxu0 0.0
    %1346 = vmatpush1.msra.mxu0 %v1318
    %1347 = vmatprep.subr.mxu0 0.0
    %1348 = vmatpush1.msra.mxu0 %v1319
    %1349 = vmatprep.subr.mxu0 0.0
    %1350 = vmatpush1.msra.mxu0 %v1320
    %1351 = vmatprep.subr.mxu0 0.0
    %1352 = vmatpush1.msra.mxu0 %v1321
    %1353 = vmatprep.subr.mxu0 0.0
    %1354 = vmatpush1.msra.mxu0 %v1322
    %1355 = vmatprep.subr.mxu0 0.0
    %1356 = vmatpush1.msra.mxu0 %v1323
    %1357 = vmatprep.subr.mxu0 0.0
    %1358 = vmatpush1.msra.mxu0 %v1324
    %1359 = vmatprep.subr.mxu0 0.0
    %1360 = vmatpush1.msra.mxu0 %v1325
    %1361 = vmatprep.subr.mxu0 0.0
    %1362 = vmatpush1.msra.mxu0 %v1326
    %1363 = vmatprep.subr.mxu0 0.0
    %1364 = vmatpush1.msra.mxu0 0.0
    %1365 = vmatprep.subr.mxu0 0.0
    %1366 = vmatpush1.msra.mxu0 0.0
    %1367 = vmatprep.subr.mxu0 0.0
    %1368 = vmatpush1.msra.mxu0 0.0
    %1369 = vmatprep.subr.mxu0 0.0
    %1370 = vmatpush1.msra.mxu0 0.0
    %1371 = vmatprep.subr.mxu0 0.0
    %1372 = vmatpush1.msra.mxu0 0.0
    %1373 = vmatprep.subr.mxu0 0.0
    %1374 = vmatpush1.msra.mxu0 0.0
    %1375 = vmatprep.subr.mxu0 0.0
    %1376 = vmatpush1.msra.mxu0 0.0
    %1377 = vmatprep.subr.mxu0 0.0
    %1378 = vmatpush1.msra.mxu0 0.0
    %1379 = vmatprep.subr.mxu0 0.0
    %1380 = vmatpush1.msra.mxu0 0.0
    %1381 = vmatprep.subr.mxu0 0.0
    %1382 = vmatpush1.msra.mxu0 0.0
    %1383 = vmatprep.subr.mxu0 0.0
    %1384 = vmatpush1.msra.mxu0 0.0
    %1385 = vmatprep.subr.mxu0 0.0
    %1386 = vmatpush1.msra.mxu0 0.0
    %1387 = vmatprep.subr.mxu0 0.0
    %1388 = vmatpush1.msra.mxu0 0.0
    %1389 = vmatprep.subr.mxu0 0.0
    %1390 = vmatpush1.msra.mxu0 0.0
    %1391 = vmatprep.subr.mxu0 0.0
    %1392 = vmatpush1.msra.mxu0 0.0
    %1393 = vmatprep.subr.mxu0 0.0
    %1394 = vmatpush1.msra.mxu0 0.0
    %1395 = vmatprep.mubr.f32.mxu0 0.0
    %1396 = vmatmul.mubr.f32.gmra.mrb[0].mxu0 %v1310
    %v1397 = vpop.f32.mrb[0].mxu0
    %v1398 = vadd.f32 %v1330, %v1397
    %v1399 = vpop.f32.mrb[0].mxu0
    %1400 = vdwg.mxu0
    %v1401 = vadd.f32 %v1223, %v1398
    %v1402 = vsel %vm1199, %v1401, 0.0
    %1403 = vadd.xlane.f32.xlu0 %v1402
    %v1404 = vpop.xlane.xlu0 %1403
    %v1405 = vmul.f32 %v1404, %v1203
    %v1406 = vsub.f32 %v1401, %v1405
    %v1407 = vmul.f32 %v1406, %v1406
    %v1408 = vsel %vm1199, %v1407, 0.0
    %1409 = vadd.xlane.f32.xlu0 %v1408
    %v1410 = vpop.xlane.xlu0 %1409
    %v1411 = vmul.f32 %v1410, %v1203
    %v1412 = vadd.f32 %v1411, 1e-05
    %v1413 = vrsqrt.pop %v1412
    %v1414 = vmul.f32 %v1406, %v1413
    %v1415 = vlaneseq
    %v1416 = vshrl.u32 %v1415, 7
    %v1417 = vsub.s32 4, %v1416
    %v1418 = vrot.slane %v1091, %v1417
    %v1419 = vmul.f32 %v1414, %v1418
    %v1420 = vlaneseq
    %v1421 = vshrl.u32 %v1420, 7
    %v1422 = vsub.s32 5, %v1421
    %v1423 = vrot.slane %v1091, %v1422
    %v1424 = vadd.f32 %v1419, %v1423
    %v1425 = vld [vmem:[%s3 + $0x38] sm:$0xff]
    %v1426 = vld [vmem:[%s3 + $0x78] sm:$0xff]
    %v1427 = vld [vmem:[%s3 + $0xb8] sm:$0xff]
    %v1428 = vld [vmem:[%s3 + $0xf8] sm:$0xff]
    %v1429 = vld [vmem:[%s3 + $0x138] ss:$0 sm:$0xff]
    %v1431 = vsel %vm203, %v1424, 0
    %1433 = vmatprep.subr.mxu0 0.0
    %1434 = vmatpush1.msra.mxu0 %v1425
    %1435 = vmatprep.subr.mxu0 0.0
    %1436 = vmatpush1.msra.mxu0 %v1426
    %1437 = vmatprep.subr.mxu0 0.0
    %1438 = vmatpush1.msra.mxu0 %v1427
    %1439 = vmatprep.subr.mxu0 0.0
    %1440 = vmatpush1.msra.mxu0 %v1428
    %1441 = vmatprep.subr.mxu0 0.0
    %1442 = vmatpush1.msra.mxu0 0.0
    %1443 = vmatprep.subr.mxu0 0.0
    %1444 = vmatpush1.msra.mxu0 0.0
    %1445 = vmatprep.subr.mxu0 0.0
    %1446 = vmatpush1.msra.mxu0 0.0
    %1447 = vmatprep.subr.mxu0 0.0
    %1448 = vmatpush1.msra.mxu0 0.0
    %1449 = vmatprep.subr.mxu0 0.0
    %1450 = vmatpush1.msra.mxu0 0.0
    %1451 = vmatprep.subr.mxu0 0.0
    %1452 = vmatpush1.msra.mxu0 0.0
    %1453 = vmatprep.subr.mxu0 0.0
    %1454 = vmatpush1.msra.mxu0 0.0
    %1455 = vmatprep.subr.mxu0 0.0
    %1456 = vmatpush1.msra.mxu0 0.0
    %1457 = vmatprep.subr.mxu0 0.0
    %1458 = vmatpush1.msra.mxu0 0.0
    %1459 = vmatprep.subr.mxu0 0.0
    %1460 = vmatpush1.msra.mxu0 0.0
    %1461 = vmatprep.subr.mxu0 0.0
    %1462 = vmatpush1.msra.mxu0 0.0
    %1463 = vmatprep.subr.mxu0 0.0
    %1464 = vmatpush1.msra.mxu0 0.0
    %1465 = vmatprep.subr.mxu0 0.0
    %1466 = vmatpush1.msra.mxu0 0.0
    %1467 = vmatprep.subr.mxu0 0.0
    %1468 = vmatpush1.msra.mxu0 0.0
    %1469 = vmatprep.subr.mxu0 0.0
    %1470 = vmatpush1.msra.mxu0 0.0
    %1471 = vmatprep.subr.mxu0 0.0
    %1472 = vmatpush1.msra.mxu0 0.0
    %1473 = vmatprep.subr.mxu0 0.0
    %1474 = vmatpush1.msra.mxu0 0.0
    %1475 = vmatprep.subr.mxu0 0.0
    %1476 = vmatpush1.msra.mxu0 0.0
    %1477 = vmatprep.subr.mxu0 0.0
    %1478 = vmatpush1.msra.mxu0 0.0
    %1479 = vmatprep.subr.mxu0 0.0
    %1480 = vmatpush1.msra.mxu0 0.0
    %1481 = vmatprep.subr.mxu0 0.0
    %1482 = vmatpush1.msra.mxu0 0.0
    %1483 = vmatprep.subr.mxu0 0.0
    %1484 = vmatpush1.msra.mxu0 0.0
    %1485 = vmatprep.subr.mxu0 0.0
    %1486 = vmatpush1.msra.mxu0 0.0
    %1487 = vmatprep.subr.mxu0 0.0
    %1488 = vmatpush1.msra.mxu0 0.0
    %1489 = vmatprep.subr.mxu0 0.0
    %1490 = vmatpush1.msra.mxu0 0.0
    %1491 = vmatprep.subr.mxu0 0.0
    %1492 = vmatpush1.msra.mxu0 0.0
    %1493 = vmatprep.subr.mxu0 0.0
    %1494 = vmatpush1.msra.mxu0 0.0
    %1495 = vmatprep.subr.mxu0 0.0
    %1496 = vmatpush1.msra.mxu0 0.0
    %1497 = vmatprep.mubr.f32.mxu0 0.0
    %1498 = vmatmul.mubr.f32.gmra.mrb[0].mxu0 %v1431
    %v1499 = vpop.f32.mrb[0].mxu0
    %v1500 = vadd.f32 %v1429, %v1499
    %v1501 = vpop.f32.mrb[0].mxu0
    %1502 = vdwg.mxu0
    %1503 = vst [vmem:[#allocation2] sm:$0x3] %v1500
    // Predicated region
    $region22: #{emotion_embedding_forward.1} parent=1 // pred_check
      _
    $region23: #{emotion_embedding_forward.1} parent=1 // pred_check_branch
      %1505 = sbr.rel (0) target = $region25
    $region24: #{emotion_embedding_forward.1} parent=1 // pred_region
      %s1507 = ssub.s32 32, 32
      %1508 = vsyncadd [#allocation3], %s1507
      %s1510 = sshll.u32 [#allocation2], 4
      %s1511 = int_to_ptr.vmem [resolvable:$true] %s1510
      %1513 = dma.vmem_to_hbm [thread:$0]  %s1511, 32, %s5, [#allocation3]
    $region25: #{emotion_embedding_forward.1} parent=1 // pred_fallthru
      _
    // Predicated region
    $region26: #{emotion_embedding_forward.1} parent=1 // pred_check
      _
    $region27: #{emotion_embedding_forward.1} parent=1 // pred_check_branch
      %1515 = sbr.rel (0) target = $region29
    $region28: #{emotion_embedding_forward.1} parent=1 // pred_region
      %1516 = dma.done [#allocation3], 32
    $region29: #{emotion_embedding_forward.1} parent=1 // pred_fallthru
      _
    %1517 = vsyncpa [#allocation3], 1

</llo_original>
